<compile_context>
chip_gen: v7x
topology: tpu7x:2x2x1
jax: 0.10.0
libtpu: 0.0.40
codegen_flags: <defaults>
</compile_context>

<pallas_src>
import functools

import jax
import jax.numpy as jnp
from jax.experimental import pallas as pl
from jax.experimental.pallas import tpu as pltpu

_LANE = 128
_SUBLANE = 8
_NEG_MASK = -1e30  # padded-class bias; exp(_NEG_MASK - max) underflows to 0.


def _round_up(n, m):
    return ((n + m - 1) // m) * m


@functools.lru_cache(maxsize=1)
def _num_tensorcores():
    """Best-effort TensorCores-per-chip query (v7x: 2, v5e/v6e: 1)."""
    try:
        info = pltpu.get_tpu_info()
    except Exception:
        return 1
    for attr in ("num_tensorcores", "tensorcore_count", "tensor_core_count",
                 "num_cores", "core_count", "cores_per_chip"):
        n = getattr(info, attr, None)
        if isinstance(n, int) and 1 <= n <= 8:
            return n
    return 1


# --------------------------------------------------------------------------
# Kernel body
# --------------------------------------------------------------------------
def _mlp_log_softmax_kernel(x_ref, w1_ref, b1_ref, w2_ref, b2_ref,
                            w3_ref, b3_ref, out_ref):
    x = x_ref[...]

    # hidden1 + ReLU   (dropout == identity in eval mode)
    h1 = jnp.dot(x.astype(w1_ref.dtype), w1_ref[...],
                 preferred_element_type=jnp.float32) + b1_ref[...]
    h1 = jnp.maximum(h1, 0.0)

    # hidden2 + ReLU
    h2 = jnp.dot(h1.astype(w2_ref.dtype), w2_ref[...],
                 preferred_element_type=jnp.float32) + b2_ref[...]
    h2 = jnp.maximum(h2, 0.0)

    # output linear (padded class columns carry a -1e30 f32 bias -> masked)
    logits = jnp.dot(h2.astype(w3_ref.dtype), w3_ref[...],
                     preferred_element_type=jnp.float32) + b3_ref[...]

    # log_softmax over the class axis (dim=1 in PyTorch == last axis here)
    m = jnp.max(logits, axis=-1, keepdims=True)
    shifted = logits - m
    lse = jnp.log(jnp.sum(jnp.exp(shifted), axis=-1, keepdims=True))
    out_ref[...] = (shifted - lse).astype(out_ref.dtype)


# --------------------------------------------------------------------------
# One-time parameter preparation (padding + optional bf16 cast)
# --------------------------------------------------------------------------
def prepare_flower_params(params, *, weight_dtype=jnp.bfloat16):
    """Pad every feature dim to a multiple of 128 lanes and cast weights once.

    Done once at init so the per-call forward does zero wrapper work on the
    weights.  Biases stay f32 (safe on v5e's f32-only VPU; keeps the -1e30
    class mask exact).
    """
    w1, b1, w2, b2, w3, b3 = (params["w1"], params["b1"], params["w2"],
                              params["b2"], params["w3"], params["b3"])
    x_count, h1_count = w1.shape
    h2_count = w2.shape[1]
    out_count = w3.shape[1]

    xcp = _round_up(x_count, _LANE)
    h1p = _round_up(h1_count, _LANE)
    h2p = _round_up(h2_count, _LANE)
    ocp = _round_up(out_count, _LANE)

    f32 = jnp.float32
    w1_p = jnp.zeros((xcp, h1p), f32).at[:x_count, :h1_count].set(w1)
    b1_p = jnp.zeros((1, h1p), f32).at[:, :h1_count].set(b1)
    w2_p = jnp.zeros((h1p, h2p), f32).at[:h1_count, :h2_count].set(w2)
    b2_p = jnp.zeros((1, h2p), f32).at[:, :h2_count].set(b2)
    w3_p = jnp.zeros((h2p, ocp), f32).at[:h2_count, :out_count].set(w3)
    # padded class columns -> huge negative logit, so log_softmax ignores them
    b3_p = jnp.full((1, ocp), _NEG_MASK, f32).at[:, :out_count].set(b3)

    # Cast only the weight matrices (MXU operands); biases stay f32.
    w1_p = w1_p.astype(weight_dtype)
    w2_p = w2_p.astype(weight_dtype)
    w3_p = w3_p.astype(weight_dtype)

    prepared = {
        "w1": w1_p, "b1": b1_p, "w2": w2_p, "b2": b2_p, "w3": w3_p, "b3": b3_p,
        "x_count": x_count, "out_count": out_count,
        "padded": (xcp, h1p, h2p, ocp),
    }
    # Materialize now so the padding cost is paid at prep time, not first call.
    jax.block_until_ready((w1_p, b1_p, w2_p, b2_p, w3_p, b3_p))
    return prepared


# --------------------------------------------------------------------------
# Forward wrapper
# --------------------------------------------------------------------------
def flower_classifier_forward(x, prepared, *, max_batch_tile=512):
    """x: (B, x_count) float32.  prepared: output of prepare_flower_params."""
    B, x_count = x.shape
    assert x_count == prepared["x_count"], "feature count mismatch"
    xcp, h1p, h2p, ocp = prepared["padded"]
    out_count = prepared["out_count"]

    # Generation-aware grid: 1 step on single-TC chips (v5e/v6e) so the MXU
    # sees the full batch height; num_tensorcores parallel steps on v7x.
    num_tc = _num_tensorcores()
    if num_tc > 1:
        bt = _round_up(pl.cdiv(B, num_tc), _SUBLANE)
    else:
        bt = _round_up(B, _SUBLANE)
    bt = max(_SUBLANE, min(bt, _round_up(max_batch_tile, _SUBLANE)))
    Bp = _round_up(B, bt)
    grid = (Bp // bt,)

    # Pad x only when actually needed (extra HBM pass otherwise avoided).
    if Bp != B or xcp != x_count:
        x_p = jnp.zeros((Bp, xcp), x.dtype).at[:B, :x_count].set(x)
    else:
        x_p = x

    weight_arrays = (prepared["w1"], prepared["b1"], prepared["w2"],
                     prepared["b2"], prepared["w3"], prepared["b3"])

    flops = 2 * Bp * (xcp * h1p + h1p * h2p + h2p * ocp)
    transcendentals = 2 * Bp * ocp
    bytes_accessed = (
        x_p.size * x_p.dtype.itemsize
        + sum(a.size * a.dtype.itemsize for a in weight_arrays)
        + Bp * ocp * 4)
    cost = pl.CostEstimate(flops=flops, transcendentals=transcendentals,
                           bytes_accessed=bytes_accessed)

    full = lambda i: (0, 0)
    in_specs = [
        pl.BlockSpec((bt, xcp), lambda i: (i, 0)),
        pl.BlockSpec((xcp, h1p), full),
        pl.BlockSpec((1, h1p), full),
        pl.BlockSpec((h1p, h2p), full),
        pl.BlockSpec((1, h2p), full),
        pl.BlockSpec((h2p, ocp), full),
        pl.BlockSpec((1, ocp), full),
    ]
    out_specs = pl.BlockSpec((bt, ocp), lambda i: (i, 0))

    out_padded = pl.pallas_call(
        _mlp_log_softmax_kernel,
        out_shape=jax.ShapeDtypeStruct((Bp, ocp), jnp.float32),
        grid=grid,
        in_specs=in_specs,
        out_specs=out_specs,
        compiler_params=pltpu.CompilerParams(
            dimension_semantics=("parallel",)),
        cost_estimate=cost,
    )(x_p, *weight_arrays)

    return out_padded[:B, :out_count]


# --------------------------------------------------------------------------
# Init + pure-JAX reference
# --------------------------------------------------------------------------
def init_params(key, x_count, hidden_unit_count, output_count):
    """Deterministic init mirroring nn.Linear default (U(-1/sqrt(fan_in), .))."""
    h2_count = hidden_unit_count // 3
    h1_count = hidden_unit_count - h2_count

    def linear_init(k, fan_in, fan_out):
        kw, kb = jax.random.split(k)
        bound = 1.0 / (fan_in ** 0.5)
        w = jax.random.uniform(kw, (fan_in, fan_out), jnp.float32, -bound, bound)
        b = jax.random.uniform(kb, (1, fan_out), jnp.float32, -bound, bound)
        return w, b

    k1, k2, k3 = jax.random.split(key, 3)
    w1, b1 = linear_init(k1, x_count, h1_count)
    w2, b2 = linear_init(k2, h1_count, h2_count)
    w3, b3 = linear_init(k3, h2_count, output_count)
    return {"w1": w1, "b1": b1, "w2": w2, "b2": b2, "w3": w3, "b3": b3}


def reference_forward(x, p):
    h1 = jnp.maximum(x @ p["w1"] + p["b1"], 0.0)
    h2 = jnp.maximum(h1 @ p["w2"] + p["b2"], 0.0)
    logits = h2 @ p["w3"] + p["b3"]
    return jax.nn.log_softmax(logits, axis=1)


if __name__ == "__main__":
    # resnet18 detector (512 features), hidden_unit_count=96 -> (h1=64, h2=32),
    # 10 output classes, batch 256.  On v5e/v6e this runs as a single grid
    # step; on v7x it splits into 2 parallel steps, one per TensorCore.
    # TODO(synk): nn.Dropout is identity here (eval-mode); training-mode RNG
    #             dropout is not reproduced.
    X_COUNT = 512        # 'resnet18'
    HIDDEN_UNITS = 96    # -> h1=64, h2=32
    OUT_COUNT = 10
    BATCH = 256

    key = jax.random.PRNGKey(0)
    k_params, k_x = jax.random.split(key)

    params = init_params(k_params, X_COUNT, HIDDEN_UNITS, OUT_COUNT)
    x = jax.random.normal(k_x, (BATCH, X_COUNT), dtype=jnp.float32)

    ref = reference_forward(x, params)

    # f32 weight path: strict check against the pure-JAX reference.
    prep_f32 = prepare_flower_params(params, weight_dtype=jnp.float32)
    out_f32 = jax.block_until_ready(flower_classifier_forward(x, prep_f32))
    assert out_f32.shape == (BATCH, OUT_COUNT)
    assert jnp.allclose(out_f32, ref, atol=1e-5, rtol=1e-5), "f32 mismatch vs reference"

    # Default bf16 weight path (MXU-friendly): looser tolerance.
    prep_bf16 = prepare_flower_params(params)
    out_bf16 = jax.block_until_ready(flower_classifier_forward(x, prep_bf16))
    assert out_bf16.shape == (BATCH, OUT_COUNT)
    assert jnp.allclose(out_bf16, ref, atol=5e-2, rtol=0.0), "bf16 mismatch vs reference"
    # log_softmax rows should sum (in prob space) to ~1
    assert jnp.allclose(jnp.sum(jnp.exp(out_bf16), axis=1), 1.0, atol=1e-4)

    print("KERNEL_OK")
</pallas_src>

<mosaic_0001>
module attributes {stable_mosaic.version = 11 : i64} {
  func.func @_mlp_log_softmax_kernel(%arg0: i32, %arg1: memref<256x512xf32, #tpu.memory_space<vmem>>, %arg2: memref<512x128xf32, #tpu.memory_space<vmem>>, %arg3: memref<1x128xf32, #tpu.memory_space<vmem>>, %arg4: memref<128x128xf32, #tpu.memory_space<vmem>>, %arg5: memref<1x128xf32, #tpu.memory_space<vmem>>, %arg6: memref<128x128xf32, #tpu.memory_space<vmem>>, %arg7: memref<1x128xf32, #tpu.memory_space<vmem>>, %arg8: memref<256x128xf32, #tpu.memory_space<vmem>>) attributes {dimension_semantics = [#tpu.dimension_semantics<parallel>], iteration_bounds = array<i64: 1>, scalar_prefetch = 0 : i64, scratch_operands = 0 : i64, tpu.core_type = #tpu.core_type<tc>, window_params = [{transform_indices = @transform_0, window_bounds = array<i64: 256, 512>}, {pipeline_mode = #tpu.pipeline_mode<synchronous>, transform_indices = @transform_1, window_bounds = array<i64: 512, 128>}, {pipeline_mode = #tpu.pipeline_mode<synchronous>, transform_indices = @transform_2, window_bounds = array<i64: 1, 128>}, {pipeline_mode = #tpu.pipeline_mode<synchronous>, transform_indices = @transform_3, window_bounds = array<i64: 128, 128>}, {pipeline_mode = #tpu.pipeline_mode<synchronous>, transform_indices = @transform_4, window_bounds = array<i64: 1, 128>}, {pipeline_mode = #tpu.pipeline_mode<synchronous>, transform_indices = @transform_5, window_bounds = array<i64: 128, 128>}, {pipeline_mode = #tpu.pipeline_mode<synchronous>, transform_indices = @transform_6, window_bounds = array<i64: 1, 128>}, {transform_indices = @transform_7, window_bounds = array<i64: 256, 128>}]} {
    %c0 = arith.constant 0 : index
    %c0_0 = arith.constant 0 : index
    %0 = vector.load %arg1[%c0, %c0_0] : memref<256x512xf32, #tpu.memory_space<vmem>>, vector<256x512xf32>
    %c0_1 = arith.constant 0 : index
    %c0_2 = arith.constant 0 : index
    %1 = vector.load %arg2[%c0_1, %c0_2] : memref<512x128xf32, #tpu.memory_space<vmem>>, vector<512x128xf32>
    %cst = arith.constant dense<0.000000e+00> : vector<256x128xf32>
    %2 = tpu.matmul %0, %1, %cst {dimension_numbers = #tpu.dot_dimension_numbers<[1], [0], [0], [1], [0, 0, 1, 1], [], []>} : vector<256x512xf32>, vector<512x128xf32>, vector<256x128xf32> -> vector<256x128xf32>
    %c0_3 = arith.constant 0 : index
    %c0_4 = arith.constant 0 : index
    %3 = vector.load %arg3[%c0_3, %c0_4] : memref<1x128xf32, #tpu.memory_space<vmem>>, vector<1x128xf32>
    %4 = vector.broadcast %3 : vector<1x128xf32> to vector<256x128xf32>
    %5 = arith.addf %2, %4 : vector<256x128xf32>
    %cst_5 = arith.constant 0.000000e+00 : f32
    %6 = vector.broadcast %cst_5 : f32 to vector<256x128xf32>
    %7 = arith.maximumf %5, %6 : vector<256x128xf32>
    %c0_6 = arith.constant 0 : index
    %c0_7 = arith.constant 0 : index
    %8 = vector.load %arg4[%c0_6, %c0_7] : memref<128x128xf32, #tpu.memory_space<vmem>>, vector<128x128xf32>
    %cst_8 = arith.constant dense<0.000000e+00> : vector<256x128xf32>
    %9 = tpu.matmul %7, %8, %cst_8 {dimension_numbers = #tpu.dot_dimension_numbers<[1], [0], [0], [1], [0, 0, 1, 1], [], []>} : vector<256x128xf32>, vector<128x128xf32>, vector<256x128xf32> -> vector<256x128xf32>
    %c0_9 = arith.constant 0 : index
    %c0_10 = arith.constant 0 : index
    %10 = vector.load %arg5[%c0_9, %c0_10] : memref<1x128xf32, #tpu.memory_space<vmem>>, vector<1x128xf32>
    %11 = vector.broadcast %10 : vector<1x128xf32> to vector<256x128xf32>
    %12 = arith.addf %9, %11 : vector<256x128xf32>
    %cst_11 = arith.constant 0.000000e+00 : f32
    %13 = vector.broadcast %cst_11 : f32 to vector<256x128xf32>
    %14 = arith.maximumf %12, %13 : vector<256x128xf32>
    %c0_12 = arith.constant 0 : index
    %c0_13 = arith.constant 0 : index
    %15 = vector.load %arg6[%c0_12, %c0_13] : memref<128x128xf32, #tpu.memory_space<vmem>>, vector<128x128xf32>
    %cst_14 = arith.constant dense<0.000000e+00> : vector<256x128xf32>
    %16 = tpu.matmul %14, %15, %cst_14 {dimension_numbers = #tpu.dot_dimension_numbers<[1], [0], [0], [1], [0, 0, 1, 1], [], []>} : vector<256x128xf32>, vector<128x128xf32>, vector<256x128xf32> -> vector<256x128xf32>
    %c0_15 = arith.constant 0 : index
    %c0_16 = arith.constant 0 : index
    %17 = vector.load %arg7[%c0_15, %c0_16] : memref<1x128xf32, #tpu.memory_space<vmem>>, vector<1x128xf32>
    %18 = vector.broadcast %17 : vector<1x128xf32> to vector<256x128xf32>
    %19 = arith.addf %16, %18 : vector<256x128xf32>
    %cst_17 = arith.constant dense<0xFF800000> : vector<256xf32>
    %20 = vector.multi_reduction <maximumf>, %19, %cst_17 [1] : vector<256x128xf32> to vector<256xf32>
    %21 = vector.shape_cast %20 : vector<256xf32> to vector<256x1xf32>
    %22 = vector.broadcast %21 : vector<256x1xf32> to vector<256x128xf32>
    %23 = arith.subf %19, %22 : vector<256x128xf32>
    %24 = math.exp %23 : vector<256x128xf32>
    %cst_18 = arith.constant dense<0.000000e+00> : vector<256xf32>
    %25 = vector.multi_reduction <add>, %24, %cst_18 [1] : vector<256x128xf32> to vector<256xf32>
    %26 = vector.shape_cast %25 : vector<256xf32> to vector<256x1xf32>
    %27 = math.log %26 : vector<256x1xf32>
    %28 = vector.broadcast %27 : vector<256x1xf32> to vector<256x128xf32>
    %29 = arith.subf %23, %28 : vector<256x128xf32>
    %c0_19 = arith.constant 0 : index
    %c0_20 = arith.constant 0 : index
    %30 = vector.load %arg8[%c0_19, %c0_20] : memref<256x128xf32, #tpu.memory_space<vmem>>, vector<256x128xf32>
    tpu.vector_store %arg8[%c0_19, %c0_20], %29 {strides = array<i32>} : memref<256x128xf32, #tpu.memory_space<vmem>>, vector<256x128xf32>,
    return
  }
  func.func @transform_0(%arg0: i32) -> (i32, i32) {
    %c0_i32 = arith.constant 0 : i32
    %c0_i32_0 = arith.constant 0 : i32
    return %arg0, %c0_i32 : i32, i32
  }
  func.func @transform_1(%arg0: i32) -> (i32, i32) {
    %c0_i32 = arith.constant 0 : i32
    %c0_i32_0 = arith.constant 0 : i32
    %c0_i32_1 = arith.constant 0 : i32
    return %c0_i32, %c0_i32_0 : i32, i32
  }
  func.func @transform_2(%arg0: i32) -> (i32, i32) {
    %c0_i32 = arith.constant 0 : i32
    %c0_i32_0 = arith.constant 0 : i32
    %c0_i32_1 = arith.constant 0 : i32
    return %c0_i32, %c0_i32_0 : i32, i32
  }
  func.func @transform_3(%arg0: i32) -> (i32, i32) {
    %c0_i32 = arith.constant 0 : i32
    %c0_i32_0 = arith.constant 0 : i32
    %c0_i32_1 = arith.constant 0 : i32
    return %c0_i32, %c0_i32_0 : i32, i32
  }
  func.func @transform_4(%arg0: i32) -> (i32, i32) {
    %c0_i32 = arith.constant 0 : i32
    %c0_i32_0 = arith.constant 0 : i32
    %c0_i32_1 = arith.constant 0 : i32
    return %c0_i32, %c0_i32_0 : i32, i32
  }
  func.func @transform_5(%arg0: i32) -> (i32, i32) {
    %c0_i32 = arith.constant 0 : i32
    %c0_i32_0 = arith.constant 0 : i32
    %c0_i32_1 = arith.constant 0 : i32
    return %c0_i32, %c0_i32_0 : i32, i32
  }
  func.func @transform_6(%arg0: i32) -> (i32, i32) {
    %c0_i32 = arith.constant 0 : i32
    %c0_i32_0 = arith.constant 0 : i32
    %c0_i32_1 = arith.constant 0 : i32
    return %c0_i32, %c0_i32_0 : i32, i32
  }
  func.func @transform_7(%arg0: i32) -> (i32, i32) {
    %c0_i32 = arith.constant 0 : i32
    %c0_i32_0 = arith.constant 0 : i32
    return %arg0, %c0_i32 : i32, i32
  }
}

</mosaic_0001>

<llo_original>
// kernel: tpu_custom_call.1
$region0: #{tpu_custom_call.1}
  #allocation0 [shape = 'u32[]', space=smem, size = 0x4, offset = 0x4, fixed_abs, tag = 'smem constant byte address 0x4 - core index']
  #allocation1 [shape = 'u32[144,128]{1,0:T(1,128)}', space=vmem, size = 0x12000, scoped, tag = 'internal scratch']
  %s0 = inlined_call_operand.hbm [shape: f32[256,512], index: 0, kind: input, shape index: {}]
  %s1 = inlined_call_operand.hbm [shape: f32[512,128], index: 1, kind: input, shape index: {}]
  %s2 = inlined_call_operand.vmem [shape: f32[1,128], index: 2, kind: input, shape index: {}]
  %s3 = inlined_call_operand.hbm [shape: f32[128,128], index: 3, kind: input, shape index: {}]
  %s4 = inlined_call_operand.vmem [shape: f32[1,128], index: 4, kind: input, shape index: {}]
  %s5 = inlined_call_operand.hbm [shape: f32[128,128], index: 5, kind: input, shape index: {}]
  %s6 = inlined_call_operand.vmem [shape: f32[1,128], index: 6, kind: input, shape index: {}]
  %s7 = inlined_call_operand.hbm [shape: f32[256,128], index: 7, kind: output, shape index: {}]
  %s8 = sld [smem:[#allocation0]]
  $region54: #{tpu_custom_call.1} parent=0
    _
  %s10 = ssub.s32 1, %s8
  %s11 = scalar_select 0, %s10, %s8
  $region1: #{tpu_custom_call.1} parent=0
    #allocation2 [shape = 'u8[524288]{0}', space=vmem, size = 0x80000, scoped, tag = 'input window, operand 0, single buffered']
    #allocation3 [shape = 's32[1]{0}', space=sflag, size = 0x4, scoped, tag = 'scoped memory for tpu_custom_call.1']
    #allocation4 [shape = 's32[1]{0}', space=sflag, size = 0x4, scoped, tag = 'scoped memory for tpu_custom_call.1']
    #allocation5 [shape = 'u8[262144]{0}', space=vmem, size = 0x40000, scoped, tag = 'input window, operand 1, single buffered']
    #allocation6 [shape = 's32[1]{0}', space=sflag, size = 0x4, scoped, tag = 'scoped memory for tpu_custom_call.1']
    #allocation7 [shape = 'u8[65536]{0}', space=vmem, size = 0x10000, scoped, tag = 'input window, operand 3, single buffered']
    #allocation8 [shape = 'u8[65536]{0}', space=vmem, size = 0x10000, scoped, tag = 'input window, operand 5, single buffered']
    #allocation9 [shape = 's32[1]{0}', space=sflag, size = 0x4, scoped, tag = 'scoped memory for tpu_custom_call.1']
    #allocation10 [shape = 'u8[131072]{0}', space=vmem, size = 0x20000, scoped, tag = 'output window, operand 0, single buffered']
    %12 = vsyncpa [#allocation3], 0
    %13 = vsyncpa [#allocation6], 0
    %14 = vsyncpa [#allocation9], 0
    %15 = vsyncpa [#allocation4], 0
    // Predicated region
    $region2: #{tpu_custom_call.1} parent=1 // pred_check
      _
    $region3: #{tpu_custom_call.1} parent=1 // pred_check_branch
      %17 = sbr.rel (0) target = $region5
    $region4: #{tpu_custom_call.1} parent=1 // pred_region
      %s19 = ssub.s32 16384, 16384
      %20 = vsyncadd [#allocation3], %s19
      %s21 = sshll.u32 [#allocation2], 4
      %s22 = int_to_ptr.vmem [resolvable:$true] %s21
      %27 = dma.hbm_to_vmem [thread:$0]  %s0, 16384, %s22, [#allocation3], 512, 512, 32
    $region5: #{tpu_custom_call.1} parent=1 // pred_fallthru
      _
    // Predicated region
    $region6: #{tpu_custom_call.1} parent=1 // pred_check
      _
    $region7: #{tpu_custom_call.1} parent=1 // pred_check_branch
      %29 = sbr.rel (0) target = $region9
    $region8: #{tpu_custom_call.1} parent=1 // pred_region
      %s31 = ssub.s32 8192, 8192
      %32 = vsyncadd [#allocation6], %s31
      %s33 = sshll.u32 [#allocation5], 4
      %s34 = int_to_ptr.vmem [resolvable:$true] %s33
      %39 = dma.hbm_to_vmem [thread:$0]  %s1, 8192, %s34, [#allocation6], 128, 128, 8
    $region9: #{tpu_custom_call.1} parent=1 // pred_fallthru
      _
    // Predicated region
    $region10: #{tpu_custom_call.1} parent=1 // pred_check
      _
    $region11: #{tpu_custom_call.1} parent=1 // pred_check_branch
      %41 = sbr.rel (0) target = $region13
    $region12: #{tpu_custom_call.1} parent=1 // pred_region
      _
    $region13: #{tpu_custom_call.1} parent=1 // pred_fallthru
      _
    // Predicated region
    $region14: #{tpu_custom_call.1} parent=1 // pred_check
      _
    $region15: #{tpu_custom_call.1} parent=1 // pred_check_branch
      %43 = sbr.rel (0) target = $region17
    $region16: #{tpu_custom_call.1} parent=1 // pred_region
      %s45 = ssub.s32 2048, 2048
      %46 = vsyncadd [#allocation6], %s45
      %s47 = sshll.u32 [#allocation7], 4
      %s48 = int_to_ptr.vmem [resolvable:$true] %s47
      %53 = dma.hbm_to_vmem [thread:$0]  %s3, 2048, %s48, [#allocation6], 128, 128, 8
    $region17: #{tpu_custom_call.1} parent=1 // pred_fallthru
      _
    // Predicated region
    $region18: #{tpu_custom_call.1} parent=1 // pred_check
      _
    $region19: #{tpu_custom_call.1} parent=1 // pred_check_branch
      %55 = sbr.rel (0) target = $region21
    $region20: #{tpu_custom_call.1} parent=1 // pred_region
      _
    $region21: #{tpu_custom_call.1} parent=1 // pred_fallthru
      _
    // Predicated region
    $region22: #{tpu_custom_call.1} parent=1 // pred_check
      _
    $region23: #{tpu_custom_call.1} parent=1 // pred_check_branch
      %57 = sbr.rel (0) target = $region25
    $region24: #{tpu_custom_call.1} parent=1 // pred_region
      %s59 = ssub.s32 2048, 2048
      %60 = vsyncadd [#allocation9], %s59
      %s61 = sshll.u32 [#allocation8], 4
      %s62 = int_to_ptr.vmem [resolvable:$true] %s61
      %67 = dma.hbm_to_vmem [thread:$0]  %s5, 2048, %s62, [#allocation9], 128, 128, 8
    $region25: #{tpu_custom_call.1} parent=1 // pred_fallthru
      _
    // Predicated region
    $region26: #{tpu_custom_call.1} parent=1 // pred_check
      _
    $region27: #{tpu_custom_call.1} parent=1 // pred_check_branch
      %69 = sbr.rel (0) target = $region29
    $region28: #{tpu_custom_call.1} parent=1 // pred_region
      _
    $region29: #{tpu_custom_call.1} parent=1 // pred_fallthru
      _
    // Predicated region
    $region30: #{tpu_custom_call.1} parent=1 // pred_check
      _
    $region31: #{tpu_custom_call.1} parent=1 // pred_check_branch
      %71 = sbr.rel (0) target = $region33
    $region32: #{tpu_custom_call.1} parent=1 // pred_region
      %72 = dma.done [#allocation3], 16384
    $region33: #{tpu_custom_call.1} parent=1 // pred_fallthru
      _
    // Predicated region
    $region34: #{tpu_custom_call.1} parent=1 // pred_check
      _
    $region35: #{tpu_custom_call.1} parent=1 // pred_check_branch
      %74 = sbr.rel (0) target = $region37
    $region36: #{tpu_custom_call.1} parent=1 // pred_region
      %75 = dma.done [#allocation6], 8192
    $region37: #{tpu_custom_call.1} parent=1 // pred_fallthru
      _
    // Predicated region
    $region38: #{tpu_custom_call.1} parent=1 // pred_check
      _
    $region39: #{tpu_custom_call.1} parent=1 // pred_check_branch
      %77 = sbr.rel (0) target = $region41
    $region40: #{tpu_custom_call.1} parent=1 // pred_region
      %78 = dma.done [#allocation6], 2048
    $region41: #{tpu_custom_call.1} parent=1 // pred_fallthru
      _
    // Predicated region
    $region42: #{tpu_custom_call.1} parent=1 // pred_check
      _
    $region43: #{tpu_custom_call.1} parent=1 // pred_check_branch
      %80 = sbr.rel (0) target = $region45
    $region44: #{tpu_custom_call.1} parent=1 // pred_region
      %81 = dma.done [#allocation9], 2048
    $region45: #{tpu_custom_call.1} parent=1 // pred_fallthru
      _
    %v82 = vld [vmem:[#allocation2] sm:$0xff]
    %v83 = vld [vmem:[#allocation2 + $0x8] sm:$0xff]
    %v84 = vld [vmem:[#allocation2 + $0x10] sm:$0xff]
    %v85 = vld [vmem:[#allocation2 + $0x18] sm:$0xff]
    %v86 = vld [vmem:[#allocation2 + $0x20] sm:$0xff]
    %v87 = vld [vmem:[#allocation2 + $0x28] sm:$0xff]
    %v88 = vld [vmem:[#allocation2 + $0x30] sm:$0xff]
    %v89 = vld [vmem:[#allocation2 + $0x38] sm:$0xff]
    %v90 = vld [vmem:[#allocation2 + $0x40] sm:$0xff]
    %v91 = vld [vmem:[#allocation2 + $0x48] sm:$0xff]
    %v92 = vld [vmem:[#allocation2 + $0x50] sm:$0xff]
    %v93 = vld [vmem:[#allocation2 + $0x58] sm:$0xff]
    %v94 = vld [vmem:[#allocation2 + $0x60] sm:$0xff]
    %v95 = vld [vmem:[#allocation2 + $0x68] sm:$0xff]
    %v96 = vld [vmem:[#allocation2 + $0x70] sm:$0xff]
    %v97 = vld [vmem:[#allocation2 + $0x78] sm:$0xff]
    %v98 = vld [vmem:[#allocation2 + $0x80] sm:$0xff]
    %v99 = vld [vmem:[#allocation2 + $0x88] sm:$0xff]
    %v100 = vld [vmem:[#allocation2 + $0x90] sm:$0xff]
    %v101 = vld [vmem:[#allocation2 + $0x98] sm:$0xff]
    %v102 = vld [vmem:[#allocation2 + $0xa0] sm:$0xff]
    %v103 = vld [vmem:[#allocation2 + $0xa8] sm:$0xff]
    %v104 = vld [vmem:[#allocation2 + $0xb0] sm:$0xff]
    %v105 = vld [vmem:[#allocation2 + $0xb8] sm:$0xff]
    %v106 = vld [vmem:[#allocation2 + $0xc0] sm:$0xff]
    %v107 = vld [vmem:[#allocation2 + $0xc8] sm:$0xff]
    %v108 = vld [vmem:[#allocation2 + $0xd0] sm:$0xff]
    %v109 = vld [vmem:[#allocation2 + $0xd8] sm:$0xff]
    %v110 = vld [vmem:[#allocation2 + $0xe0] sm:$0xff]
    %v111 = vld [vmem:[#allocation2 + $0xe8] sm:$0xff]
    %v112 = vld [vmem:[#allocation2 + $0xf0] sm:$0xff]
    %v113 = vld [vmem:[#allocation2 + $0xf8] sm:$0xff]
    %v114 = vld [vmem:[#allocation2 + $0x100] sm:$0xff]
    %v115 = vld [vmem:[#allocation2 + $0x108] sm:$0xff]
    %v116 = vld [vmem:[#allocation2 + $0x110] sm:$0xff]
    %v117 = vld [vmem:[#allocation2 + $0x118] sm:$0xff]
    %v118 = vld [vmem:[#allocation2 + $0x120] sm:$0xff]
    %v119 = vld [vmem:[#allocation2 + $0x128] sm:$0xff]
    %v120 = vld [vmem:[#allocation2 + $0x130] sm:$0xff]
    %v121 = vld [vmem:[#allocation2 + $0x138] sm:$0xff]
    %v122 = vld [vmem:[#allocation2 + $0x140] sm:$0xff]
    %v123 = vld [vmem:[#allocation2 + $0x148] sm:$0xff]
    %v124 = vld [vmem:[#allocation2 + $0x150] sm:$0xff]
    %v125 = vld [vmem:[#allocation2 + $0x158] sm:$0xff]
    %v126 = vld [vmem:[#allocation2 + $0x160] sm:$0xff]
    %v127 = vld [vmem:[#allocation2 + $0x168] sm:$0xff]
    %v128 = vld [vmem:[#allocation2 + $0x170] sm:$0xff]
    %v129 = vld [vmem:[#allocation2 + $0x178] sm:$0xff]
    %v130 = vld [vmem:[#allocation2 + $0x180] sm:$0xff]
    %v131 = vld [vmem:[#allocation2 + $0x188] sm:$0xff]
    %v132 = vld [vmem:[#allocation2 + $0x190] sm:$0xff]
    %v133 = vld [vmem:[#allocation2 + $0x198] sm:$0xff]
    %v134 = vld [vmem:[#allocation2 + $0x1a0] sm:$0xff]
    %v135 = vld [vmem:[#allocation2 + $0x1a8] sm:$0xff]
    %v136 = vld [vmem:[#allocation2 + $0x1b0] sm:$0xff]
    %v137 = vld [vmem:[#allocation2 + $0x1b8] sm:$0xff]
    %v138 = vld [vmem:[#allocation2 + $0x1c0] sm:$0xff]
    %v139 = vld [vmem:[#allocation2 + $0x1c8] sm:$0xff]
    %v140 = vld [vmem:[#allocation2 + $0x1d0] sm:$0xff]
    %v141 = vld [vmem:[#allocation2 + $0x1d8] sm:$0xff]
    %v142 = vld [vmem:[#allocation2 + $0x1e0] sm:$0xff]
    %v143 = vld [vmem:[#allocation2 + $0x1e8] sm:$0xff]
    %v144 = vld [vmem:[#allocation2 + $0x1f0] sm:$0xff]
    %v145 = vld [vmem:[#allocation2 + $0x1f8] sm:$0xff]
    %v146 = vld [vmem:[#allocation2 + $0x200] sm:$0xff]
    %v147 = vld [vmem:[#allocation2 + $0x208] sm:$0xff]
    %v148 = vld [vmem:[#allocation2 + $0x210] sm:$0xff]
    %v149 = vld [vmem:[#allocation2 + $0x218] sm:$0xff]
    %v150 = vld [vmem:[#allocation2 + $0x220] sm:$0xff]
    %v151 = vld [vmem:[#allocation2 + $0x228] sm:$0xff]
    %v152 = vld [vmem:[#allocation2 + $0x230] sm:$0xff]
    %v153 = vld [vmem:[#allocation2 + $0x238] sm:$0xff]
    %v154 = vld [vmem:[#allocation2 + $0x240] sm:$0xff]
    %v155 = vld [vmem:[#allocation2 + $0x248] sm:$0xff]
    %v156 = vld [vmem:[#allocation2 + $0x250] sm:$0xff]
    %v157 = vld [vmem:[#allocation2 + $0x258] sm:$0xff]
    %v158 = vld [vmem:[#allocation2 + $0x260] sm:$0xff]
    %v159 = vld [vmem:[#allocation2 + $0x268] sm:$0xff]
    %v160 = vld [vmem:[#allocation2 + $0x270] sm:$0xff]
    %v161 = vld [vmem:[#allocation2 + $0x278] sm:$0xff]
    %v162 = vld [vmem:[#allocation2 + $0x280] sm:$0xff]
    %v163 = vld [vmem:[#allocation2 + $0x288] sm:$0xff]
    %v164 = vld [vmem:[#allocation2 + $0x290] sm:$0xff]
    %v165 = vld [vmem:[#allocation2 + $0x298] sm:$0xff]
    %v166 = vld [vmem:[#allocation2 + $0x2a0] sm:$0xff]
    %v167 = vld [vmem:[#allocation2 + $0x2a8] sm:$0xff]
    %v168 = vld [vmem:[#allocation2 + $0x2b0] sm:$0xff]
    %v169 = vld [vmem:[#allocation2 + $0x2b8] sm:$0xff]
    %v170 = vld [vmem:[#allocation2 + $0x2c0] sm:$0xff]
    %v171 = vld [vmem:[#allocation2 + $0x2c8] sm:$0xff]
    %v172 = vld [vmem:[#allocation2 + $0x2d0] sm:$0xff]
    %v173 = vld [vmem:[#allocation2 + $0x2d8] sm:$0xff]
    %v174 = vld [vmem:[#allocation2 + $0x2e0] sm:$0xff]
    %v175 = vld [vmem:[#allocation2 + $0x2e8] sm:$0xff]
    %v176 = vld [vmem:[#allocation2 + $0x2f0] sm:$0xff]
    %v177 = vld [vmem:[#allocation2 + $0x2f8] sm:$0xff]
    %v178 = vld [vmem:[#allocation2 + $0x300] sm:$0xff]
    %v179 = vld [vmem:[#allocation2 + $0x308] sm:$0xff]
    %v180 = vld [vmem:[#allocation2 + $0x310] sm:$0xff]
    %v181 = vld [vmem:[#allocation2 + $0x318] sm:$0xff]
    %v182 = vld [vmem:[#allocation2 + $0x320] sm:$0xff]
    %v183 = vld [vmem:[#allocation2 + $0x328] sm:$0xff]
    %v184 = vld [vmem:[#allocation2 + $0x330] sm:$0xff]
    %v185 = vld [vmem:[#allocation2 + $0x338] sm:$0xff]
    %v186 = vld [vmem:[#allocation2 + $0x340] sm:$0xff]
    %v187 = vld [vmem:[#allocation2 + $0x348] sm:$0xff]
    %v188 = vld [vmem:[#allocation2 + $0x350] sm:$0xff]
    %v189 = vld [vmem:[#allocation2 + $0x358] sm:$0xff]
    %v190 = vld [vmem:[#allocation2 + $0x360] sm:$0xff]
    %v191 = vld [vmem:[#allocation2 + $0x368] sm:$0xff]
    %v192 = vld [vmem:[#allocation2 + $0x370] sm:$0xff]
    %v193 = vld [vmem:[#allocation2 + $0x378] sm:$0xff]
    %v194 = vld [vmem:[#allocation2 + $0x380] sm:$0xff]
    %v195 = vld [vmem:[#allocation2 + $0x388] sm:$0xff]
    %v196 = vld [vmem:[#allocation2 + $0x390] sm:$0xff]
    %v197 = vld [vmem:[#allocation2 + $0x398] sm:$0xff]
    %v198 = vld [vmem:[#allocation2 + $0x3a0] sm:$0xff]
    %v199 = vld [vmem:[#allocation2 + $0x3a8] sm:$0xff]
    %v200 = vld [vmem:[#allocation2 + $0x3b0] sm:$0xff]
    %v201 = vld [vmem:[#allocation2 + $0x3b8] sm:$0xff]
    %v202 = vld [vmem:[#allocation2 + $0x3c0] sm:$0xff]
    %v203 = vld [vmem:[#allocation2 + $0x3c8] sm:$0xff]
    %v204 = vld [vmem:[#allocation2 + $0x3d0] sm:$0xff]
    %v205 = vld [vmem:[#allocation2 + $0x3d8] sm:$0xff]
    %v206 = vld [vmem:[#allocation2 + $0x3e0] sm:$0xff]
    %v207 = vld [vmem:[#allocation2 + $0x3e8] sm:$0xff]
    %v208 = vld [vmem:[#allocation2 + $0x3f0] sm:$0xff]
    %v209 = vld [vmem:[#allocation2 + $0x3f8] sm:$0xff]
    %v210 = vld [vmem:[#allocation5] sm:$0xff]
    %v211 = vld [vmem:[#allocation5 + $0x8] sm:$0xff]
    %v212 = vld [vmem:[#allocation5 + $0x10] sm:$0xff]
    %v213 = vld [vmem:[#allocation5 + $0x18] sm:$0xff]
    %v214 = vld [vmem:[#allocation5 + $0x20] sm:$0xff]
    %v215 = vld [vmem:[#allocation5 + $0x28] sm:$0xff]
    %v216 = vld [vmem:[#allocation5 + $0x30] sm:$0xff]
    %v217 = vld [vmem:[#allocation5 + $0x38] sm:$0xff]
    %v218 = vld [vmem:[#allocation5 + $0x40] sm:$0xff]
    %v219 = vld [vmem:[#allocation5 + $0x48] sm:$0xff]
    %v220 = vld [vmem:[#allocation5 + $0x50] sm:$0xff]
    %v221 = vld [vmem:[#allocation5 + $0x58] sm:$0xff]
    %v222 = vld [vmem:[#allocation5 + $0x60] sm:$0xff]
    %v223 = vld [vmem:[#allocation5 + $0x68] sm:$0xff]
    %v224 = vld [vmem:[#allocation5 + $0x70] sm:$0xff]
    %v225 = vld [vmem:[#allocation5 + $0x78] sm:$0xff]
    %v226 = vld [vmem:[#allocation5 + $0x80] sm:$0xff]
    %v227 = vld [vmem:[#allocation5 + $0x88] sm:$0xff]
    %v228 = vld [vmem:[#allocation5 + $0x90] sm:$0xff]
    %v229 = vld [vmem:[#allocation5 + $0x98] sm:$0xff]
    %v230 = vld [vmem:[#allocation5 + $0xa0] sm:$0xff]
    %v231 = vld [vmem:[#allocation5 + $0xa8] sm:$0xff]
    %v232 = vld [vmem:[#allocation5 + $0xb0] sm:$0xff]
    %v233 = vld [vmem:[#allocation5 + $0xb8] sm:$0xff]
    %v234 = vld [vmem:[#allocation5 + $0xc0] sm:$0xff]
    %v235 = vld [vmem:[#allocation5 + $0xc8] sm:$0xff]
    %v236 = vld [vmem:[#allocation5 + $0xd0] sm:$0xff]
    %v237 = vld [vmem:[#allocation5 + $0xd8] sm:$0xff]
    %v238 = vld [vmem:[#allocation5 + $0xe0] sm:$0xff]
    %v239 = vld [vmem:[#allocation5 + $0xe8] sm:$0xff]
    %v240 = vld [vmem:[#allocation5 + $0xf0] sm:$0xff]
    %v241 = vld [vmem:[#allocation5 + $0xf8] sm:$0xff]
    %v242 = vld [vmem:[#allocation5 + $0x100] sm:$0xff]
    %v243 = vld [vmem:[#allocation5 + $0x108] sm:$0xff]
    %v244 = vld [vmem:[#allocation5 + $0x110] sm:$0xff]
    %v245 = vld [vmem:[#allocation5 + $0x118] sm:$0xff]
    %v246 = vld [vmem:[#allocation5 + $0x120] sm:$0xff]
    %v247 = vld [vmem:[#allocation5 + $0x128] sm:$0xff]
    %v248 = vld [vmem:[#allocation5 + $0x130] sm:$0xff]
    %v249 = vld [vmem:[#allocation5 + $0x138] sm:$0xff]
    %v250 = vld [vmem:[#allocation5 + $0x140] sm:$0xff]
    %v251 = vld [vmem:[#allocation5 + $0x148] sm:$0xff]
    %v252 = vld [vmem:[#allocation5 + $0x150] sm:$0xff]
    %v253 = vld [vmem:[#allocation5 + $0x158] sm:$0xff]
    %v254 = vld [vmem:[#allocation5 + $0x160] sm:$0xff]
    %v255 = vld [vmem:[#allocation5 + $0x168] sm:$0xff]
    %v256 = vld [vmem:[#allocation5 + $0x170] sm:$0xff]
    %v257 = vld [vmem:[#allocation5 + $0x178] sm:$0xff]
    %v258 = vld [vmem:[#allocation5 + $0x180] sm:$0xff]
    %v259 = vld [vmem:[#allocation5 + $0x188] sm:$0xff]
    %v260 = vld [vmem:[#allocation5 + $0x190] sm:$0xff]
    %v261 = vld [vmem:[#allocation5 + $0x198] sm:$0xff]
    %v262 = vld [vmem:[#allocation5 + $0x1a0] sm:$0xff]
    %v263 = vld [vmem:[#allocation5 + $0x1a8] sm:$0xff]
    %v264 = vld [vmem:[#allocation5 + $0x1b0] sm:$0xff]
    %v265 = vld [vmem:[#allocation5 + $0x1b8] sm:$0xff]
    %v266 = vld [vmem:[#allocation5 + $0x1c0] sm:$0xff]
    %v267 = vld [vmem:[#allocation5 + $0x1c8] sm:$0xff]
    %v268 = vld [vmem:[#allocation5 + $0x1d0] sm:$0xff]
    %v269 = vld [vmem:[#allocation5 + $0x1d8] sm:$0xff]
    %v270 = vld [vmem:[#allocation5 + $0x1e0] sm:$0xff]
    %v271 = vld [vmem:[#allocation5 + $0x1e8] sm:$0xff]
    %v272 = vld [vmem:[#allocation5 + $0x1f0] sm:$0xff]
    %v273 = vld [vmem:[#allocation5 + $0x1f8] sm:$0xff]
    %v274 = vld [vmem:[%s2] sm:$0x1]
    %v276 = vlaneseq
    %v277 = vshrl.u32 %v276, 7
    %v278 = vsub.s32 0, %v277
    %v279 = vrot.slane %v274, %v278
    %281 = vmatprep.subr.mxu0 0.0
    %282 = vmatpush1.msra.mxu0 %v210
    %283 = vmatprep.subr.mxu0 0.0
    %284 = vmatpush1.msra.mxu0 %v211
    %285 = vmatprep.subr.mxu0 0.0
    %286 = vmatpush1.msra.mxu0 %v212
    %287 = vmatprep.subr.mxu0 0.0
    %288 = vmatpush1.msra.mxu0 %v213
    %289 = vmatprep.subr.mxu0 0.0
    %290 = vmatpush1.msra.mxu0 %v214
    %291 = vmatprep.subr.mxu0 0.0
    %292 = vmatpush1.msra.mxu0 %v215
    %293 = vmatprep.subr.mxu0 0.0
    %294 = vmatpush1.msra.mxu0 %v216
    %295 = vmatprep.subr.mxu0 0.0
    %296 = vmatpush1.msra.mxu0 %v217
    %297 = vmatprep.subr.mxu0 0.0
    %298 = vmatpush1.msra.mxu0 %v218
    %299 = vmatprep.subr.mxu0 0.0
    %300 = vmatpush1.msra.mxu0 %v219
    %301 = vmatprep.subr.mxu0 0.0
    %302 = vmatpush1.msra.mxu0 %v220
    %303 = vmatprep.subr.mxu0 0.0
    %304 = vmatpush1.msra.mxu0 %v221
    %305 = vmatprep.subr.mxu0 0.0
    %306 = vmatpush1.msra.mxu0 %v222
    %307 = vmatprep.subr.mxu0 0.0
    %308 = vmatpush1.msra.mxu0 %v223
    %309 = vmatprep.subr.mxu0 0.0
    %310 = vmatpush1.msra.mxu0 %v224
    %311 = vmatprep.subr.mxu0 0.0
    %312 = vmatpush1.msra.mxu0 %v225
    %313 = vmatprep.subr.mxu0 0.0
    %314 = vmatpush1.msra.mxu0 %v226
    %315 = vmatprep.subr.mxu0 0.0
    %316 = vmatpush1.msra.mxu0 %v227
    %317 = vmatprep.subr.mxu0 0.0
    %318 = vmatpush1.msra.mxu0 %v228
    %319 = vmatprep.subr.mxu0 0.0
    %320 = vmatpush1.msra.mxu0 %v229
    %321 = vmatprep.subr.mxu0 0.0
    %322 = vmatpush1.msra.mxu0 %v230
    %323 = vmatprep.subr.mxu0 0.0
    %324 = vmatpush1.msra.mxu0 %v231
    %325 = vmatprep.subr.mxu0 0.0
    %326 = vmatpush1.msra.mxu0 %v232
    %327 = vmatprep.subr.mxu0 0.0
    %328 = vmatpush1.msra.mxu0 %v233
    %329 = vmatprep.subr.mxu0 0.0
    %330 = vmatpush1.msra.mxu0 %v234
    %331 = vmatprep.subr.mxu0 0.0
    %332 = vmatpush1.msra.mxu0 %v235
    %333 = vmatprep.subr.mxu0 0.0
    %334 = vmatpush1.msra.mxu0 %v236
    %335 = vmatprep.subr.mxu0 0.0
    %336 = vmatpush1.msra.mxu0 %v237
    %337 = vmatprep.subr.mxu0 0.0
    %338 = vmatpush1.msra.mxu0 %v238
    %339 = vmatprep.subr.mxu0 0.0
    %340 = vmatpush1.msra.mxu0 %v239
    %341 = vmatprep.subr.mxu0 0.0
    %342 = vmatpush1.msra.mxu0 %v240
    %343 = vmatprep.subr.mxu0 0.0
    %344 = vmatpush1.msra.mxu0 %v241
    %345 = vmatprep.mubr.f32.mxu0 %v83
    %346 = vmatmul.mubr.f32.gmra.mrb[0].mxu0 %v82
    %v347 = vpop.f32.mrb[0].mxu0
    %v348 = vadd.f32 %v279, %v347
    %v349 = vpop.f32.mrb[0].mxu0
    %350 = vmatprep.mubr.f32.mxu0 %v87
    %351 = vmatmul.mubr.f32.gmra.mrb[0].mxu0 %v86
    %v352 = vpop.f32.mrb[0].mxu0
    %v353 = vadd.f32 %v279, %v352
    %v354 = vpop.f32.mrb[0].mxu0
    %355 = vmatprep.mubr.f32.mxu0 %v91
    %356 = vmatmul.mubr.f32.gmra.mrb[0].mxu0 %v90
    %v357 = vpop.f32.mrb[0].mxu0
    %v358 = vadd.f32 %v279, %v357
    %v359 = vpop.f32.mrb[0].mxu0
    %360 = vmatprep.mubr.f32.mxu0 %v95
    %361 = vmatmul.mubr.f32.gmra.mrb[0].mxu0 %v94
    %v362 = vpop.f32.mrb[0].mxu0
    %v363 = vadd.f32 %v279, %v362
    %v364 = vpop.f32.mrb[0].mxu0
    %365 = vmatprep.mubr.f32.mxu0 %v99
    %366 = vmatmul.mubr.f32.gmra.mrb[0].mxu0 %v98
    %v367 = vpop.f32.mrb[0].mxu0
    %v368 = vadd.f32 %v279, %v367
    %v369 = vpop.f32.mrb[0].mxu0
    %370 = vmatprep.mubr.f32.mxu0 %v103
    %371 = vmatmul.mubr.f32.gmra.mrb[0].mxu0 %v102
    %v372 = vpop.f32.mrb[0].mxu0
    %v373 = vadd.f32 %v279, %v372
    %v374 = vpop.f32.mrb[0].mxu0
    %375 = vmatprep.mubr.f32.mxu0 %v107
    %376 = vmatmul.mubr.f32.gmra.mrb[0].mxu0 %v106
    %v377 = vpop.f32.mrb[0].mxu0
    %v378 = vadd.f32 %v279, %v377
    %v379 = vpop.f32.mrb[0].mxu0
    %380 = vmatprep.mubr.f32.mxu0 %v111
    %381 = vmatmul.mubr.f32.gmra.mrb[0].mxu0 %v110
    %v382 = vpop.f32.mrb[0].mxu0
    %v383 = vadd.f32 %v279, %v382
    %v384 = vpop.f32.mrb[0].mxu0
    %385 = vmatprep.mubr.f32.mxu0 %v115
    %386 = vmatmul.mubr.f32.gmra.mrb[0].mxu0 %v114
    %v387 = vpop.f32.mrb[0].mxu0
    %v388 = vadd.f32 %v279, %v387
    %v389 = vpop.f32.mrb[0].mxu0
    %390 = vmatprep.mubr.f32.mxu0 %v119
    %391 = vmatmul.mubr.f32.gmra.mrb[0].mxu0 %v118
    %v392 = vpop.f32.mrb[0].mxu0
    %v393 = vadd.f32 %v279, %v392
    %v394 = vpop.f32.mrb[0].mxu0
    %395 = vmatprep.mubr.f32.mxu0 %v123
    %396 = vmatmul.mubr.f32.gmra.mrb[0].mxu0 %v122
    %v397 = vpop.f32.mrb[0].mxu0
    %v398 = vadd.f32 %v279, %v397
    %v399 = vpop.f32.mrb[0].mxu0
    %400 = vmatprep.mubr.f32.mxu0 %v127
    %401 = vmatmul.mubr.f32.gmra.mrb[0].mxu0 %v126
    %v402 = vpop.f32.mrb[0].mxu0
    %v403 = vadd.f32 %v279, %v402
    %v404 = vpop.f32.mrb[0].mxu0
    %405 = vmatprep.mubr.f32.mxu0 %v131
    %406 = vmatmul.mubr.f32.gmra.mrb[0].mxu0 %v130
    %v407 = vpop.f32.mrb[0].mxu0
    %v408 = vadd.f32 %v279, %v407
    %v409 = vpop.f32.mrb[0].mxu0
    %410 = vmatprep.mubr.f32.mxu0 %v135
    %411 = vmatmul.mubr.f32.gmra.mrb[0].mxu0 %v134
    %v412 = vpop.f32.mrb[0].mxu0
    %v413 = vadd.f32 %v279, %v412
    %v414 = vpop.f32.mrb[0].mxu0
    %415 = vmatprep.mubr.f32.mxu0 %v139
    %416 = vmatmul.mubr.f32.gmra.mrb[0].mxu0 %v138
    %v417 = vpop.f32.mrb[0].mxu0
    %v418 = vadd.f32 %v279, %v417
    %v419 = vpop.f32.mrb[0].mxu0
    %420 = vmatprep.mubr.f32.mxu0 %v143
    %421 = vmatmul.mubr.f32.gmra.mrb[0].mxu0 %v142
    %v422 = vpop.f32.mrb[0].mxu0
    %v423 = vadd.f32 %v279, %v422
    %v424 = vpop.f32.mrb[0].mxu0
    %425 = vmatprep.mubr.f32.mxu0 %v147
    %426 = vmatmul.mubr.f32.gmra.mrb[0].mxu0 %v146
    %v427 = vpop.f32.mrb[0].mxu0
    %v428 = vadd.f32 %v279, %v427
    %v429 = vpop.f32.mrb[0].mxu0
    %430 = vmatprep.mubr.f32.mxu0 %v151
    %431 = vmatmul.mubr.f32.gmra.mrb[0].mxu0 %v150
    %v432 = vpop.f32.mrb[0].mxu0
    %v433 = vadd.f32 %v279, %v432
    %v434 = vpop.f32.mrb[0].mxu0
    %435 = vmatprep.mubr.f32.mxu0 %v155
    %436 = vmatmul.mubr.f32.gmra.mrb[0].mxu0 %v154
    %v437 = vpop.f32.mrb[0].mxu0
    %v438 = vadd.f32 %v279, %v437
    %v439 = vpop.f32.mrb[0].mxu0
    %440 = vmatprep.mubr.f32.mxu0 %v159
    %441 = vmatmul.mubr.f32.gmra.mrb[0].mxu0 %v158
    %v442 = vpop.f32.mrb[0].mxu0
    %v443 = vadd.f32 %v279, %v442
    %v444 = vpop.f32.mrb[0].mxu0
    %445 = vmatprep.mubr.f32.mxu0 %v163
    %446 = vmatmul.mubr.f32.gmra.mrb[0].mxu0 %v162
    %v447 = vpop.f32.mrb[0].mxu0
    %v448 = vadd.f32 %v279, %v447
    %v449 = vpop.f32.mrb[0].mxu0
    %450 = vmatprep.mubr.f32.mxu0 %v167
    %451 = vmatmul.mubr.f32.gmra.mrb[0].mxu0 %v166
    %v452 = vpop.f32.mrb[0].mxu0
    %v453 = vadd.f32 %v279, %v452
    %v454 = vpop.f32.mrb[0].mxu0
    %455 = vmatprep.mubr.f32.mxu0 %v171
    %456 = vmatmul.mubr.f32.gmra.mrb[0].mxu0 %v170
    %v457 = vpop.f32.mrb[0].mxu0
    %v458 = vadd.f32 %v279, %v457
    %v459 = vpop.f32.mrb[0].mxu0
    %460 = vmatprep.mubr.f32.mxu0 %v175
    %461 = vmatmul.mubr.f32.gmra.mrb[0].mxu0 %v174
    %v462 = vpop.f32.mrb[0].mxu0
    %v463 = vadd.f32 %v279, %v462
    %v464 = vpop.f32.mrb[0].mxu0
    %465 = vmatprep.mubr.f32.mxu0 %v179
    %466 = vmatmul.mubr.f32.gmra.mrb[0].mxu0 %v178
    %v467 = vpop.f32.mrb[0].mxu0
    %v468 = vadd.f32 %v279, %v467
    %v469 = vpop.f32.mrb[0].mxu0
    %470 = vmatprep.mubr.f32.mxu0 %v183
    %471 = vmatmul.mubr.f32.gmra.mrb[0].mxu0 %v182
    %v472 = vpop.f32.mrb[0].mxu0
    %v473 = vadd.f32 %v279, %v472
    %v474 = vpop.f32.mrb[0].mxu0
    %475 = vmatprep.mubr.f32.mxu0 %v187
    %476 = vmatmul.mubr.f32.gmra.mrb[0].mxu0 %v186
    %v477 = vpop.f32.mrb[0].mxu0
    %v478 = vadd.f32 %v279, %v477
    %v479 = vpop.f32.mrb[0].mxu0
    %480 = vmatprep.mubr.f32.mxu0 %v191
    %481 = vmatmul.mubr.f32.gmra.mrb[0].mxu0 %v190
    %v482 = vpop.f32.mrb[0].mxu0
    %v483 = vadd.f32 %v279, %v482
    %v484 = vpop.f32.mrb[0].mxu0
    %485 = vmatprep.mubr.f32.mxu0 %v195
    %486 = vmatmul.mubr.f32.gmra.mrb[0].mxu0 %v194
    %v487 = vpop.f32.mrb[0].mxu0
    %v488 = vadd.f32 %v279, %v487
    %v489 = vpop.f32.mrb[0].mxu0
    %490 = vmatprep.mubr.f32.mxu0 %v199
    %491 = vmatmul.mubr.f32.gmra.mrb[0].mxu0 %v198
    %v492 = vpop.f32.mrb[0].mxu0
    %v493 = vadd.f32 %v279, %v492
    %v494 = vpop.f32.mrb[0].mxu0
    %495 = vmatprep.mubr.f32.mxu0 %v203
    %496 = vmatmul.mubr.f32.gmra.mrb[0].mxu0 %v202
    %v497 = vpop.f32.mrb[0].mxu0
    %v498 = vadd.f32 %v279, %v497
    %v499 = vpop.f32.mrb[0].mxu0
    %500 = vmatprep.mubr.f32.mxu0 %v207
    %501 = vmatmul.mubr.f32.gmra.mrb[0].mxu0 %v206
    %v502 = vpop.f32.mrb[0].mxu0
    %v503 = vadd.f32 %v279, %v502
    %v504 = vpop.f32.mrb[0].mxu0
    %505 = vdwg.mxu0
    %506 = vmatprep.subr.mxu0 0.0
    %507 = vmatpush1.msra.mxu0 %v242
    %508 = vmatprep.subr.mxu0 0.0
    %509 = vmatpush1.msra.mxu0 %v243
    %510 = vmatprep.subr.mxu0 0.0
    %511 = vmatpush1.msra.mxu0 %v244
    %512 = vmatprep.subr.mxu0 0.0
    %513 = vmatpush1.msra.mxu0 %v245
    %514 = vmatprep.subr.mxu0 0.0
    %515 = vmatpush1.msra.mxu0 %v246
    %516 = vmatprep.subr.mxu0 0.0
    %517 = vmatpush1.msra.mxu0 %v247
    %518 = vmatprep.subr.mxu0 0.0
    %519 = vmatpush1.msra.mxu0 %v248
    %520 = vmatprep.subr.mxu0 0.0
    %521 = vmatpush1.msra.mxu0 %v249
    %522 = vmatprep.subr.mxu0 0.0
    %523 = vmatpush1.msra.mxu0 %v250
    %524 = vmatprep.subr.mxu0 0.0
    %525 = vmatpush1.msra.mxu0 %v251
    %526 = vmatprep.subr.mxu0 0.0
    %527 = vmatpush1.msra.mxu0 %v252
    %528 = vmatprep.subr.mxu0 0.0
    %529 = vmatpush1.msra.mxu0 %v253
    %530 = vmatprep.subr.mxu0 0.0
    %531 = vmatpush1.msra.mxu0 %v254
    %532 = vmatprep.subr.mxu0 0.0
    %533 = vmatpush1.msra.mxu0 %v255
    %534 = vmatprep.subr.mxu0 0.0
    %535 = vmatpush1.msra.mxu0 %v256
    %536 = vmatprep.subr.mxu0 0.0
    %537 = vmatpush1.msra.mxu0 %v257
    %538 = vmatprep.subr.mxu0 0.0
    %539 = vmatpush1.msra.mxu0 %v258
    %540 = vmatprep.subr.mxu0 0.0
    %541 = vmatpush1.msra.mxu0 %v259
    %542 = vmatprep.subr.mxu0 0.0
    %543 = vmatpush1.msra.mxu0 %v260
    %544 = vmatprep.subr.mxu0 0.0
    %545 = vmatpush1.msra.mxu0 %v261
    %546 = vmatprep.subr.mxu0 0.0
    %547 = vmatpush1.msra.mxu0 %v262
    %548 = vmatprep.subr.mxu0 0.0
    %549 = vmatpush1.msra.mxu0 %v263
    %550 = vmatprep.subr.mxu0 0.0
    %551 = vmatpush1.msra.mxu0 %v264
    %552 = vmatprep.subr.mxu0 0.0
    %553 = vmatpush1.msra.mxu0 %v265
    %554 = vmatprep.subr.mxu0 0.0
    %555 = vmatpush1.msra.mxu0 %v266
    %556 = vmatprep.subr.mxu0 0.0
    %557 = vmatpush1.msra.mxu0 %v267
    %558 = vmatprep.subr.mxu0 0.0
    %559 = vmatpush1.msra.mxu0 %v268
    %560 = vmatprep.subr.mxu0 0.0
    %561 = vmatpush1.msra.mxu0 %v269
    %562 = vmatprep.subr.mxu0 0.0
    %563 = vmatpush1.msra.mxu0 %v270
    %564 = vmatprep.subr.mxu0 0.0
    %565 = vmatpush1.msra.mxu0 %v271
    %566 = vmatprep.subr.mxu0 0.0
    %567 = vmatpush1.msra.mxu0 %v272
    %568 = vmatprep.subr.mxu0 0.0
    %569 = vmatpush1.msra.mxu0 %v273
    %570 = vmatprep.mubr.f32.mxu0 %v85
    %571 = vmatmul.mubr.f32.gmra.mrb[0].mxu0 %v84
    %v572 = vpop.f32.mrb[0].mxu0
    %v573 = vadd.f32 %v348, %v572
    %v574 = vpop.f32.mrb[0].mxu0
    %575 = vmatprep.mubr.f32.mxu0 %v89
    %576 = vmatmul.mubr.f32.gmra.mrb[0].mxu0 %v88
    %v577 = vpop.f32.mrb[0].mxu0
    %v578 = vadd.f32 %v353, %v577
    %v579 = vpop.f32.mrb[0].mxu0
    %580 = vmatprep.mubr.f32.mxu0 %v93
    %581 = vmatmul.mubr.f32.gmra.mrb[0].mxu0 %v92
    %v582 = vpop.f32.mrb[0].mxu0
    %v583 = vadd.f32 %v358, %v582
    %v584 = vpop.f32.mrb[0].mxu0
    %585 = vmatprep.mubr.f32.mxu0 %v97
    %586 = vmatmul.mubr.f32.gmra.mrb[0].mxu0 %v96
    %v587 = vpop.f32.mrb[0].mxu0
    %v588 = vadd.f32 %v363, %v587
    %v589 = vpop.f32.mrb[0].mxu0
    %590 = vmatprep.mubr.f32.mxu0 %v101
    %591 = vmatmul.mubr.f32.gmra.mrb[0].mxu0 %v100
    %v592 = vpop.f32.mrb[0].mxu0
    %v593 = vadd.f32 %v368, %v592
    %v594 = vpop.f32.mrb[0].mxu0
    %595 = vmatprep.mubr.f32.mxu0 %v105
    %596 = vmatmul.mubr.f32.gmra.mrb[0].mxu0 %v104
    %v597 = vpop.f32.mrb[0].mxu0
    %v598 = vadd.f32 %v373, %v597
    %v599 = vpop.f32.mrb[0].mxu0
    %600 = vmatprep.mubr.f32.mxu0 %v109
    %601 = vmatmul.mubr.f32.gmra.mrb[0].mxu0 %v108
    %v602 = vpop.f32.mrb[0].mxu0
    %v603 = vadd.f32 %v378, %v602
    %v604 = vpop.f32.mrb[0].mxu0
    %605 = vmatprep.mubr.f32.mxu0 %v113
    %606 = vmatmul.mubr.f32.gmra.mrb[0].mxu0 %v112
    %v607 = vpop.f32.mrb[0].mxu0
    %v608 = vadd.f32 %v383, %v607
    %v609 = vpop.f32.mrb[0].mxu0
    %610 = vmatprep.mubr.f32.mxu0 %v117
    %611 = vmatmul.mubr.f32.gmra.mrb[0].mxu0 %v116
    %v612 = vpop.f32.mrb[0].mxu0
    %v613 = vadd.f32 %v388, %v612
    %v614 = vpop.f32.mrb[0].mxu0
    %615 = vmatprep.mubr.f32.mxu0 %v121
    %616 = vmatmul.mubr.f32.gmra.mrb[0].mxu0 %v120
    %v617 = vpop.f32.mrb[0].mxu0
    %v618 = vadd.f32 %v393, %v617
    %v619 = vpop.f32.mrb[0].mxu0
    %620 = vmatprep.mubr.f32.mxu0 %v125
    %621 = vmatmul.mubr.f32.gmra.mrb[0].mxu0 %v124
    %v622 = vpop.f32.mrb[0].mxu0
    %v623 = vadd.f32 %v398, %v622
    %v624 = vpop.f32.mrb[0].mxu0
    %625 = vmatprep.mubr.f32.mxu0 %v129
    %626 = vmatmul.mubr.f32.gmra.mrb[0].mxu0 %v128
    %v627 = vpop.f32.mrb[0].mxu0
    %v628 = vadd.f32 %v403, %v627
    %v629 = vpop.f32.mrb[0].mxu0
    %630 = vmatprep.mubr.f32.mxu0 %v133
    %631 = vmatmul.mubr.f32.gmra.mrb[0].mxu0 %v132
    %v632 = vpop.f32.mrb[0].mxu0
    %v633 = vadd.f32 %v408, %v632
    %v634 = vpop.f32.mrb[0].mxu0
    %635 = vmatprep.mubr.f32.mxu0 %v137
    %636 = vmatmul.mubr.f32.gmra.mrb[0].mxu0 %v136
    %v637 = vpop.f32.mrb[0].mxu0
    %v638 = vadd.f32 %v413, %v637
    %v639 = vpop.f32.mrb[0].mxu0
    %640 = vmatprep.mubr.f32.mxu0 %v141
    %641 = vmatmul.mubr.f32.gmra.mrb[0].mxu0 %v140
    %v642 = vpop.f32.mrb[0].mxu0
    %v643 = vadd.f32 %v418, %v642
    %v644 = vpop.f32.mrb[0].mxu0
    %645 = vmatprep.mubr.f32.mxu0 %v145
    %646 = vmatmul.mubr.f32.gmra.mrb[0].mxu0 %v144
    %v647 = vpop.f32.mrb[0].mxu0
    %v648 = vadd.f32 %v423, %v647
    %v649 = vpop.f32.mrb[0].mxu0
    %650 = vmatprep.mubr.f32.mxu0 %v149
    %651 = vmatmul.mubr.f32.gmra.mrb[0].mxu0 %v148
    %v652 = vpop.f32.mrb[0].mxu0
    %v653 = vadd.f32 %v428, %v652
    %v654 = vpop.f32.mrb[0].mxu0
    %655 = vmatprep.mubr.f32.mxu0 %v153
    %656 = vmatmul.mubr.f32.gmra.mrb[0].mxu0 %v152
    %v657 = vpop.f32.mrb[0].mxu0
    %v658 = vadd.f32 %v433, %v657
    %v659 = vpop.f32.mrb[0].mxu0
    %660 = vmatprep.mubr.f32.mxu0 %v157
    %661 = vmatmul.mubr.f32.gmra.mrb[0].mxu0 %v156
    %v662 = vpop.f32.mrb[0].mxu0
    %v663 = vadd.f32 %v438, %v662
    %v664 = vpop.f32.mrb[0].mxu0
    %665 = vmatprep.mubr.f32.mxu0 %v161
    %666 = vmatmul.mubr.f32.gmra.mrb[0].mxu0 %v160
    %v667 = vpop.f32.mrb[0].mxu0
    %v668 = vadd.f32 %v443, %v667
    %v669 = vpop.f32.mrb[0].mxu0
    %670 = vmatprep.mubr.f32.mxu0 %v165
    %671 = vmatmul.mubr.f32.gmra.mrb[0].mxu0 %v164
    %v672 = vpop.f32.mrb[0].mxu0
    %v673 = vadd.f32 %v448, %v672
    %v674 = vpop.f32.mrb[0].mxu0
    %675 = vmatprep.mubr.f32.mxu0 %v169
    %676 = vmatmul.mubr.f32.gmra.mrb[0].mxu0 %v168
    %v677 = vpop.f32.mrb[0].mxu0
    %v678 = vadd.f32 %v453, %v677
    %v679 = vpop.f32.mrb[0].mxu0
    %680 = vmatprep.mubr.f32.mxu0 %v173
    %681 = vmatmul.mubr.f32.gmra.mrb[0].mxu0 %v172
    %v682 = vpop.f32.mrb[0].mxu0
    %v683 = vadd.f32 %v458, %v682
    %v684 = vpop.f32.mrb[0].mxu0
    %685 = vmatprep.mubr.f32.mxu0 %v177
    %686 = vmatmul.mubr.f32.gmra.mrb[0].mxu0 %v176
    %v687 = vpop.f32.mrb[0].mxu0
    %v688 = vadd.f32 %v463, %v687
    %v689 = vpop.f32.mrb[0].mxu0
    %690 = vmatprep.mubr.f32.mxu0 %v181
    %691 = vmatmul.mubr.f32.gmra.mrb[0].mxu0 %v180
    %v692 = vpop.f32.mrb[0].mxu0
    %v693 = vadd.f32 %v468, %v692
    %v694 = vpop.f32.mrb[0].mxu0
    %695 = vmatprep.mubr.f32.mxu0 %v185
    %696 = vmatmul.mubr.f32.gmra.mrb[0].mxu0 %v184
    %v697 = vpop.f32.mrb[0].mxu0
    %v698 = vadd.f32 %v473, %v697
    %v699 = vpop.f32.mrb[0].mxu0
    %700 = vmatprep.mubr.f32.mxu0 %v189
    %701 = vmatmul.mubr.f32.gmra.mrb[0].mxu0 %v188
    %v702 = vpop.f32.mrb[0].mxu0
    %v703 = vadd.f32 %v478, %v702
    %v704 = vpop.f32.mrb[0].mxu0
    %705 = vmatprep.mubr.f32.mxu0 %v193
    %706 = vmatmul.mubr.f32.gmra.mrb[0].mxu0 %v192
    %v707 = vpop.f32.mrb[0].mxu0
    %v708 = vadd.f32 %v483, %v707
    %v709 = vpop.f32.mrb[0].mxu0
    %710 = vmatprep.mubr.f32.mxu0 %v197
    %711 = vmatmul.mubr.f32.gmra.mrb[0].mxu0 %v196
    %v712 = vpop.f32.mrb[0].mxu0
    %v713 = vadd.f32 %v488, %v712
    %v714 = vpop.f32.mrb[0].mxu0
    %715 = vmatprep.mubr.f32.mxu0 %v201
    %716 = vmatmul.mubr.f32.gmra.mrb[0].mxu0 %v200
    %v717 = vpop.f32.mrb[0].mxu0
    %v718 = vadd.f32 %v493, %v717
    %v719 = vpop.f32.mrb[0].mxu0
    %720 = vmatprep.mubr.f32.mxu0 %v205
    %721 = vmatmul.mubr.f32.gmra.mrb[0].mxu0 %v204
    %v722 = vpop.f32.mrb[0].mxu0
    %v723 = vadd.f32 %v498, %v722
    %v724 = vpop.f32.mrb[0].mxu0
    %725 = vmatprep.mubr.f32.mxu0 %v209
    %726 = vmatmul.mubr.f32.gmra.mrb[0].mxu0 %v208
    %v727 = vpop.f32.mrb[0].mxu0
    %v728 = vadd.f32 %v503, %v727
    %v729 = vpop.f32.mrb[0].mxu0
    %730 = vdwg.mxu0
    %v731 = vmax.f32 %v573, 0.0
    %v732 = vmax.f32 %v578, 0.0
    %v733 = vmax.f32 %v583, 0.0
    %v734 = vmax.f32 %v588, 0.0
    %v735 = vmax.f32 %v593, 0.0
    %v736 = vmax.f32 %v598, 0.0
    %v737 = vmax.f32 %v603, 0.0
    %v738 = vmax.f32 %v608, 0.0
    %v739 = vmax.f32 %v613, 0.0
    %v740 = vmax.f32 %v618, 0.0
    %v741 = vmax.f32 %v623, 0.0
    %v742 = vmax.f32 %v628, 0.0
    %v743 = vmax.f32 %v633, 0.0
    %v744 = vmax.f32 %v638, 0.0
    %v745 = vmax.f32 %v643, 0.0
    %v746 = vmax.f32 %v648, 0.0
    %v747 = vmax.f32 %v653, 0.0
    %v748 = vmax.f32 %v658, 0.0
    %v749 = vmax.f32 %v663, 0.0
    %v750 = vmax.f32 %v668, 0.0
    %v751 = vmax.f32 %v673, 0.0
    %v752 = vmax.f32 %v678, 0.0
    %v753 = vmax.f32 %v683, 0.0
    %v754 = vmax.f32 %v688, 0.0
    %v755 = vmax.f32 %v693, 0.0
    %v756 = vmax.f32 %v698, 0.0
    %v757 = vmax.f32 %v703, 0.0
    %v758 = vmax.f32 %v708, 0.0
    %v759 = vmax.f32 %v713, 0.0
    %v760 = vmax.f32 %v718, 0.0
    %v761 = vmax.f32 %v723, 0.0
    %v762 = vmax.f32 %v728, 0.0
    %v763 = vld [vmem:[#allocation7] sm:$0xff]
    %v764 = vld [vmem:[#allocation7 + $0x8] sm:$0xff]
    %v765 = vld [vmem:[#allocation7 + $0x10] sm:$0xff]
    %v766 = vld [vmem:[#allocation7 + $0x18] sm:$0xff]
    %v767 = vld [vmem:[#allocation7 + $0x20] sm:$0xff]
    %v768 = vld [vmem:[#allocation7 + $0x28] sm:$0xff]
    %v769 = vld [vmem:[#allocation7 + $0x30] sm:$0xff]
    %v770 = vld [vmem:[#allocation7 + $0x38] sm:$0xff]
    %v771 = vld [vmem:[#allocation7 + $0x40] sm:$0xff]
    %v772 = vld [vmem:[#allocation7 + $0x48] sm:$0xff]
    %v773 = vld [vmem:[#allocation7 + $0x50] sm:$0xff]
    %v774 = vld [vmem:[#allocation7 + $0x58] sm:$0xff]
    %v775 = vld [vmem:[#allocation7 + $0x60] sm:$0xff]
    %v776 = vld [vmem:[#allocation7 + $0x68] sm:$0xff]
    %v777 = vld [vmem:[#allocation7 + $0x70] sm:$0xff]
    %v778 = vld [vmem:[#allocation7 + $0x78] sm:$0xff]
    %v779 = vld [vmem:[%s4] sm:$0x1]
    %v781 = vlaneseq
    %v782 = vshrl.u32 %v781, 7
    %v783 = vsub.s32 0, %v782
    %v784 = vrot.slane %v779, %v783
    %786 = vmatprep.subr.mxu0 0.0
    %787 = vmatpush1.msra.mxu0 %v763
    %788 = vmatprep.subr.mxu0 0.0
    %789 = vmatpush1.msra.mxu0 %v764
    %790 = vmatprep.subr.mxu0 0.0
    %791 = vmatpush1.msra.mxu0 %v765
    %792 = vmatprep.subr.mxu0 0.0
    %793 = vmatpush1.msra.mxu0 %v766
    %794 = vmatprep.subr.mxu0 0.0
    %795 = vmatpush1.msra.mxu0 %v767
    %796 = vmatprep.subr.mxu0 0.0
    %797 = vmatpush1.msra.mxu0 %v768
    %798 = vmatprep.subr.mxu0 0.0
    %799 = vmatpush1.msra.mxu0 %v769
    %800 = vmatprep.subr.mxu0 0.0
    %801 = vmatpush1.msra.mxu0 %v770
    %802 = vmatprep.subr.mxu0 0.0
    %803 = vmatpush1.msra.mxu0 %v771
    %804 = vmatprep.subr.mxu0 0.0
    %805 = vmatpush1.msra.mxu0 %v772
    %806 = vmatprep.subr.mxu0 0.0
    %807 = vmatpush1.msra.mxu0 %v773
    %808 = vmatprep.subr.mxu0 0.0
    %809 = vmatpush1.msra.mxu0 %v774
    %810 = vmatprep.subr.mxu0 0.0
    %811 = vmatpush1.msra.mxu0 %v775
    %812 = vmatprep.subr.mxu0 0.0
    %813 = vmatpush1.msra.mxu0 %v776
    %814 = vmatprep.subr.mxu0 0.0
    %815 = vmatpush1.msra.mxu0 %v777
    %816 = vmatprep.subr.mxu0 0.0
    %817 = vmatpush1.msra.mxu0 %v778
    %818 = vmatprep.subr.mxu0 0.0
    %819 = vmatpush1.msra.mxu0 0.0
    %820 = vmatprep.subr.mxu0 0.0
    %821 = vmatpush1.msra.mxu0 0.0
    %822 = vmatprep.subr.mxu0 0.0
    %823 = vmatpush1.msra.mxu0 0.0
    %824 = vmatprep.subr.mxu0 0.0
    %825 = vmatpush1.msra.mxu0 0.0
    %826 = vmatprep.subr.mxu0 0.0
    %827 = vmatpush1.msra.mxu0 0.0
    %828 = vmatprep.subr.mxu0 0.0
    %829 = vmatpush1.msra.mxu0 0.0
    %830 = vmatprep.subr.mxu0 0.0
    %831 = vmatpush1.msra.mxu0 0.0
    %832 = vmatprep.subr.mxu0 0.0
    %833 = vmatpush1.msra.mxu0 0.0
    %834 = vmatprep.subr.mxu0 0.0
    %835 = vmatpush1.msra.mxu0 0.0
    %836 = vmatprep.subr.mxu0 0.0
    %837 = vmatpush1.msra.mxu0 0.0
    %838 = vmatprep.subr.mxu0 0.0
    %839 = vmatpush1.msra.mxu0 0.0
    %840 = vmatprep.subr.mxu0 0.0
    %841 = vmatpush1.msra.mxu0 0.0
    %842 = vmatprep.subr.mxu0 0.0
    %843 = vmatpush1.msra.mxu0 0.0
    %844 = vmatprep.subr.mxu0 0.0
    %845 = vmatpush1.msra.mxu0 0.0
    %846 = vmatprep.subr.mxu0 0.0
    %847 = vmatpush1.msra.mxu0 0.0
    %848 = vmatprep.subr.mxu0 0.0
    %849 = vmatpush1.msra.mxu0 0.0
    %850 = vmatprep.mubr.f32.mxu0 0.0
    %851 = vmatmul.mubr.f32.gmra.mrb[0].mxu0 %v731
    %v852 = vpop.f32.mrb[0].mxu0
    %v853 = vadd.f32 %v784, %v852
    %v854 = vpop.f32.mrb[0].mxu0
    %855 = vmatprep.mubr.f32.mxu0 0.0
    %856 = vmatmul.mubr.f32.gmra.mrb[0].mxu0 %v732
    %v857 = vpop.f32.mrb[0].mxu0
    %v858 = vadd.f32 %v784, %v857
    %v859 = vpop.f32.mrb[0].mxu0
    %860 = vmatprep.mubr.f32.mxu0 0.0
    %861 = vmatmul.mubr.f32.gmra.mrb[0].mxu0 %v733
    %v862 = vpop.f32.mrb[0].mxu0
    %v863 = vadd.f32 %v784, %v862
    %v864 = vpop.f32.mrb[0].mxu0
    %865 = vmatprep.mubr.f32.mxu0 0.0
    %866 = vmatmul.mubr.f32.gmra.mrb[0].mxu0 %v734
    %v867 = vpop.f32.mrb[0].mxu0
    %v868 = vadd.f32 %v784, %v867
    %v869 = vpop.f32.mrb[0].mxu0
    %870 = vmatprep.mubr.f32.mxu0 0.0
    %871 = vmatmul.mubr.f32.gmra.mrb[0].mxu0 %v735
    %v872 = vpop.f32.mrb[0].mxu0
    %v873 = vadd.f32 %v784, %v872
    %v874 = vpop.f32.mrb[0].mxu0
    %875 = vmatprep.mubr.f32.mxu0 0.0
    %876 = vmatmul.mubr.f32.gmra.mrb[0].mxu0 %v736
    %v877 = vpop.f32.mrb[0].mxu0
    %v878 = vadd.f32 %v784, %v877
    %v879 = vpop.f32.mrb[0].mxu0
    %880 = vmatprep.mubr.f32.mxu0 0.0
    %881 = vmatmul.mubr.f32.gmra.mrb[0].mxu0 %v737
    %v882 = vpop.f32.mrb[0].mxu0
    %v883 = vadd.f32 %v784, %v882
    %v884 = vpop.f32.mrb[0].mxu0
    %885 = vmatprep.mubr.f32.mxu0 0.0
    %886 = vmatmul.mubr.f32.gmra.mrb[0].mxu0 %v738
    %v887 = vpop.f32.mrb[0].mxu0
    %v888 = vadd.f32 %v784, %v887
    %v889 = vpop.f32.mrb[0].mxu0
    %890 = vmatprep.mubr.f32.mxu0 0.0
    %891 = vmatmul.mubr.f32.gmra.mrb[0].mxu0 %v739
    %v892 = vpop.f32.mrb[0].mxu0
    %v893 = vadd.f32 %v784, %v892
    %v894 = vpop.f32.mrb[0].mxu0
    %895 = vmatprep.mubr.f32.mxu0 0.0
    %896 = vmatmul.mubr.f32.gmra.mrb[0].mxu0 %v740
    %v897 = vpop.f32.mrb[0].mxu0
    %v898 = vadd.f32 %v784, %v897
    %v899 = vpop.f32.mrb[0].mxu0
    %900 = vmatprep.mubr.f32.mxu0 0.0
    %901 = vmatmul.mubr.f32.gmra.mrb[0].mxu0 %v741
    %v902 = vpop.f32.mrb[0].mxu0
    %v903 = vadd.f32 %v784, %v902
    %v904 = vpop.f32.mrb[0].mxu0
    %905 = vmatprep.mubr.f32.mxu0 0.0
    %906 = vmatmul.mubr.f32.gmra.mrb[0].mxu0 %v742
    %v907 = vpop.f32.mrb[0].mxu0
    %v908 = vadd.f32 %v784, %v907
    %v909 = vpop.f32.mrb[0].mxu0
    %910 = vmatprep.mubr.f32.mxu0 0.0
    %911 = vmatmul.mubr.f32.gmra.mrb[0].mxu0 %v743
    %v912 = vpop.f32.mrb[0].mxu0
    %v913 = vadd.f32 %v784, %v912
    %v914 = vpop.f32.mrb[0].mxu0
    %915 = vmatprep.mubr.f32.mxu0 0.0
    %916 = vmatmul.mubr.f32.gmra.mrb[0].mxu0 %v744
    %v917 = vpop.f32.mrb[0].mxu0
    %v918 = vadd.f32 %v784, %v917
    %v919 = vpop.f32.mrb[0].mxu0
    %920 = vmatprep.mubr.f32.mxu0 0.0
    %921 = vmatmul.mubr.f32.gmra.mrb[0].mxu0 %v745
    %v922 = vpop.f32.mrb[0].mxu0
    %v923 = vadd.f32 %v784, %v922
    %v924 = vpop.f32.mrb[0].mxu0
    %925 = vmatprep.mubr.f32.mxu0 0.0
    %926 = vmatmul.mubr.f32.gmra.mrb[0].mxu0 %v746
    %v927 = vpop.f32.mrb[0].mxu0
    %v928 = vadd.f32 %v784, %v927
    %v929 = vpop.f32.mrb[0].mxu0
    %930 = vmatprep.mubr.f32.mxu0 0.0
    %931 = vmatmul.mubr.f32.gmra.mrb[0].mxu0 %v747
    %v932 = vpop.f32.mrb[0].mxu0
    %v933 = vadd.f32 %v784, %v932
    %v934 = vpop.f32.mrb[0].mxu0
    %935 = vmatprep.mubr.f32.mxu0 0.0
    %936 = vmatmul.mubr.f32.gmra.mrb[0].mxu0 %v748
    %v937 = vpop.f32.mrb[0].mxu0
    %v938 = vadd.f32 %v784, %v937
    %v939 = vpop.f32.mrb[0].mxu0
    %940 = vmatprep.mubr.f32.mxu0 0.0
    %941 = vmatmul.mubr.f32.gmra.mrb[0].mxu0 %v749
    %v942 = vpop.f32.mrb[0].mxu0
    %v943 = vadd.f32 %v784, %v942
    %v944 = vpop.f32.mrb[0].mxu0
    %945 = vmatprep.mubr.f32.mxu0 0.0
    %946 = vmatmul.mubr.f32.gmra.mrb[0].mxu0 %v750
    %v947 = vpop.f32.mrb[0].mxu0
    %v948 = vadd.f32 %v784, %v947
    %v949 = vpop.f32.mrb[0].mxu0
    %950 = vmatprep.mubr.f32.mxu0 0.0
    %951 = vmatmul.mubr.f32.gmra.mrb[0].mxu0 %v751
    %v952 = vpop.f32.mrb[0].mxu0
    %v953 = vadd.f32 %v784, %v952
    %v954 = vpop.f32.mrb[0].mxu0
    %955 = vmatprep.mubr.f32.mxu0 0.0
    %956 = vmatmul.mubr.f32.gmra.mrb[0].mxu0 %v752
    %v957 = vpop.f32.mrb[0].mxu0
    %v958 = vadd.f32 %v784, %v957
    %v959 = vpop.f32.mrb[0].mxu0
    %960 = vmatprep.mubr.f32.mxu0 0.0
    %961 = vmatmul.mubr.f32.gmra.mrb[0].mxu0 %v753
    %v962 = vpop.f32.mrb[0].mxu0
    %v963 = vadd.f32 %v784, %v962
    %v964 = vpop.f32.mrb[0].mxu0
    %965 = vmatprep.mubr.f32.mxu0 0.0
    %966 = vmatmul.mubr.f32.gmra.mrb[0].mxu0 %v754
    %v967 = vpop.f32.mrb[0].mxu0
    %v968 = vadd.f32 %v784, %v967
    %v969 = vpop.f32.mrb[0].mxu0
    %970 = vmatprep.mubr.f32.mxu0 0.0
    %971 = vmatmul.mubr.f32.gmra.mrb[0].mxu0 %v755
    %v972 = vpop.f32.mrb[0].mxu0
    %v973 = vadd.f32 %v784, %v972
    %v974 = vpop.f32.mrb[0].mxu0
    %975 = vmatprep.mubr.f32.mxu0 0.0
    %976 = vmatmul.mubr.f32.gmra.mrb[0].mxu0 %v756
    %v977 = vpop.f32.mrb[0].mxu0
    %v978 = vadd.f32 %v784, %v977
    %v979 = vpop.f32.mrb[0].mxu0
    %980 = vmatprep.mubr.f32.mxu0 0.0
    %981 = vmatmul.mubr.f32.gmra.mrb[0].mxu0 %v757
    %v982 = vpop.f32.mrb[0].mxu0
    %v983 = vadd.f32 %v784, %v982
    %v984 = vpop.f32.mrb[0].mxu0
    %985 = vmatprep.mubr.f32.mxu0 0.0
    %986 = vmatmul.mubr.f32.gmra.mrb[0].mxu0 %v758
    %v987 = vpop.f32.mrb[0].mxu0
    %v988 = vadd.f32 %v784, %v987
    %v989 = vpop.f32.mrb[0].mxu0
    %990 = vmatprep.mubr.f32.mxu0 0.0
    %991 = vmatmul.mubr.f32.gmra.mrb[0].mxu0 %v759
    %v992 = vpop.f32.mrb[0].mxu0
    %v993 = vadd.f32 %v784, %v992
    %v994 = vpop.f32.mrb[0].mxu0
    %995 = vmatprep.mubr.f32.mxu0 0.0
    %996 = vmatmul.mubr.f32.gmra.mrb[0].mxu0 %v760
    %v997 = vpop.f32.mrb[0].mxu0
    %v998 = vadd.f32 %v784, %v997
    %v999 = vpop.f32.mrb[0].mxu0
    %1000 = vmatprep.mubr.f32.mxu0 0.0
    %1001 = vmatmul.mubr.f32.gmra.mrb[0].mxu0 %v761
    %v1002 = vpop.f32.mrb[0].mxu0
    %v1003 = vadd.f32 %v784, %v1002
    %v1004 = vpop.f32.mrb[0].mxu0
    %1005 = vmatprep.mubr.f32.mxu0 0.0
    %1006 = vmatmul.mubr.f32.gmra.mrb[0].mxu0 %v762
    %v1007 = vpop.f32.mrb[0].mxu0
    %v1008 = vadd.f32 %v784, %v1007
    %v1009 = vpop.f32.mrb[0].mxu0
    %1010 = vdwg.mxu0
    %v1011 = vmax.f32 %v853, 0.0
    %v1012 = vmax.f32 %v858, 0.0
    %v1013 = vmax.f32 %v863, 0.0
    %v1014 = vmax.f32 %v868, 0.0
    %v1015 = vmax.f32 %v873, 0.0
    %v1016 = vmax.f32 %v878, 0.0
    %v1017 = vmax.f32 %v883, 0.0
    %v1018 = vmax.f32 %v888, 0.0
    %v1019 = vmax.f32 %v893, 0.0
    %v1020 = vmax.f32 %v898, 0.0
    %v1021 = vmax.f32 %v903, 0.0
    %v1022 = vmax.f32 %v908, 0.0
    %v1023 = vmax.f32 %v913, 0.0
    %v1024 = vmax.f32 %v918, 0.0
    %v1025 = vmax.f32 %v923, 0.0
    %v1026 = vmax.f32 %v928, 0.0
    %v1027 = vmax.f32 %v933, 0.0
    %v1028 = vmax.f32 %v938, 0.0
    %v1029 = vmax.f32 %v943, 0.0
    %v1030 = vmax.f32 %v948, 0.0
    %v1031 = vmax.f32 %v953, 0.0
    %v1032 = vmax.f32 %v958, 0.0
    %v1033 = vmax.f32 %v963, 0.0
    %v1034 = vmax.f32 %v968, 0.0
    %v1035 = vmax.f32 %v973, 0.0
    %v1036 = vmax.f32 %v978, 0.0
    %v1037 = vmax.f32 %v983, 0.0
    %v1038 = vmax.f32 %v988, 0.0
    %v1039 = vmax.f32 %v993, 0.0
    %v1040 = vmax.f32 %v998, 0.0
    %v1041 = vmax.f32 %v1003, 0.0
    %v1042 = vmax.f32 %v1008, 0.0
    %v1043 = vld [vmem:[#allocation8] sm:$0xff]
    %v1044 = vld [vmem:[#allocation8 + $0x8] sm:$0xff]
    %v1045 = vld [vmem:[#allocation8 + $0x10] sm:$0xff]
    %v1046 = vld [vmem:[#allocation8 + $0x18] sm:$0xff]
    %v1047 = vld [vmem:[#allocation8 + $0x20] sm:$0xff]
    %v1048 = vld [vmem:[#allocation8 + $0x28] sm:$0xff]
    %v1049 = vld [vmem:[#allocation8 + $0x30] sm:$0xff]
    %v1050 = vld [vmem:[#allocation8 + $0x38] sm:$0xff]
    %v1051 = vld [vmem:[#allocation8 + $0x40] sm:$0xff]
    %v1052 = vld [vmem:[#allocation8 + $0x48] sm:$0xff]
    %v1053 = vld [vmem:[#allocation8 + $0x50] sm:$0xff]
    %v1054 = vld [vmem:[#allocation8 + $0x58] sm:$0xff]
    %v1055 = vld [vmem:[#allocation8 + $0x60] sm:$0xff]
    %v1056 = vld [vmem:[#allocation8 + $0x68] sm:$0xff]
    %v1057 = vld [vmem:[#allocation8 + $0x70] sm:$0xff]
    %v1058 = vld [vmem:[#allocation8 + $0x78] sm:$0xff]
    %v1059 = vld [vmem:[%s6] sm:$0x1]
    %v1061 = vlaneseq
    %v1062 = vshrl.u32 %v1061, 7
    %v1063 = vsub.s32 0, %v1062
    %v1064 = vrot.slane %v1059, %v1063
    %1066 = vmatprep.subr.mxu0 0.0
    %1067 = vmatpush1.msra.mxu0 %v1043
    %1068 = vmatprep.subr.mxu0 0.0
    %1069 = vmatpush1.msra.mxu0 %v1044
    %1070 = vmatprep.subr.mxu0 0.0
    %1071 = vmatpush1.msra.mxu0 %v1045
    %1072 = vmatprep.subr.mxu0 0.0
    %1073 = vmatpush1.msra.mxu0 %v1046
    %1074 = vmatprep.subr.mxu0 0.0
    %1075 = vmatpush1.msra.mxu0 %v1047
    %1076 = vmatprep.subr.mxu0 0.0
    %1077 = vmatpush1.msra.mxu0 %v1048
    %1078 = vmatprep.subr.mxu0 0.0
    %1079 = vmatpush1.msra.mxu0 %v1049
    %1080 = vmatprep.subr.mxu0 0.0
    %1081 = vmatpush1.msra.mxu0 %v1050
    %1082 = vmatprep.subr.mxu0 0.0
    %1083 = vmatpush1.msra.mxu0 %v1051
    %1084 = vmatprep.subr.mxu0 0.0
    %1085 = vmatpush1.msra.mxu0 %v1052
    %1086 = vmatprep.subr.mxu0 0.0
    %1087 = vmatpush1.msra.mxu0 %v1053
    %1088 = vmatprep.subr.mxu0 0.0
    %1089 = vmatpush1.msra.mxu0 %v1054
    %1090 = vmatprep.subr.mxu0 0.0
    %1091 = vmatpush1.msra.mxu0 %v1055
    %1092 = vmatprep.subr.mxu0 0.0
    %1093 = vmatpush1.msra.mxu0 %v1056
    %1094 = vmatprep.subr.mxu0 0.0
    %1095 = vmatpush1.msra.mxu0 %v1057
    %1096 = vmatprep.subr.mxu0 0.0
    %1097 = vmatpush1.msra.mxu0 %v1058
    %1098 = vmatprep.subr.mxu0 0.0
    %1099 = vmatpush1.msra.mxu0 0.0
    %1100 = vmatprep.subr.mxu0 0.0
    %1101 = vmatpush1.msra.mxu0 0.0
    %1102 = vmatprep.subr.mxu0 0.0
    %1103 = vmatpush1.msra.mxu0 0.0
    %1104 = vmatprep.subr.mxu0 0.0
    %1105 = vmatpush1.msra.mxu0 0.0
    %1106 = vmatprep.subr.mxu0 0.0
    %1107 = vmatpush1.msra.mxu0 0.0
    %1108 = vmatprep.subr.mxu0 0.0
    %1109 = vmatpush1.msra.mxu0 0.0
    %1110 = vmatprep.subr.mxu0 0.0
    %1111 = vmatpush1.msra.mxu0 0.0
    %1112 = vmatprep.subr.mxu0 0.0
    %1113 = vmatpush1.msra.mxu0 0.0
    %1114 = vmatprep.subr.mxu0 0.0
    %1115 = vmatpush1.msra.mxu0 0.0
    %1116 = vmatprep.subr.mxu0 0.0
    %1117 = vmatpush1.msra.mxu0 0.0
    %1118 = vmatprep.subr.mxu0 0.0
    %1119 = vmatpush1.msra.mxu0 0.0
    %1120 = vmatprep.subr.mxu0 0.0
    %1121 = vmatpush1.msra.mxu0 0.0
    %1122 = vmatprep.subr.mxu0 0.0
    %1123 = vmatpush1.msra.mxu0 0.0
    %1124 = vmatprep.subr.mxu0 0.0
    %1125 = vmatpush1.msra.mxu0 0.0
    %1126 = vmatprep.subr.mxu0 0.0
    %1127 = vmatpush1.msra.mxu0 0.0
    %1128 = vmatprep.subr.mxu0 0.0
    %1129 = vmatpush1.msra.mxu0 0.0
    %1130 = vmatprep.mubr.f32.mxu0 0.0
    %1131 = vmatmul.mubr.f32.gmra.mrb[0].mxu0 %v1011
    %v1132 = vpop.f32.mrb[0].mxu0
    %v1133 = vadd.f32 %v1064, %v1132
    %v1134 = vpop.f32.mrb[0].mxu0
    %1135 = vmatprep.mubr.f32.mxu0 0.0
    %1136 = vmatmul.mubr.f32.gmra.mrb[0].mxu0 %v1012
    %v1137 = vpop.f32.mrb[0].mxu0
    %v1138 = vadd.f32 %v1064, %v1137
    %v1139 = vpop.f32.mrb[0].mxu0
    %1140 = vmatprep.mubr.f32.mxu0 0.0
    %1141 = vmatmul.mubr.f32.gmra.mrb[0].mxu0 %v1013
    %v1142 = vpop.f32.mrb[0].mxu0
    %v1143 = vadd.f32 %v1064, %v1142
    %v1144 = vpop.f32.mrb[0].mxu0
    %1145 = vmatprep.mubr.f32.mxu0 0.0
    %1146 = vmatmul.mubr.f32.gmra.mrb[0].mxu0 %v1014
    %v1147 = vpop.f32.mrb[0].mxu0
    %v1148 = vadd.f32 %v1064, %v1147
    %v1149 = vpop.f32.mrb[0].mxu0
    %1150 = vmatprep.mubr.f32.mxu0 0.0
    %1151 = vmatmul.mubr.f32.gmra.mrb[0].mxu0 %v1015
    %v1152 = vpop.f32.mrb[0].mxu0
    %v1153 = vadd.f32 %v1064, %v1152
    %v1154 = vpop.f32.mrb[0].mxu0
    %1155 = vmatprep.mubr.f32.mxu0 0.0
    %1156 = vmatmul.mubr.f32.gmra.mrb[0].mxu0 %v1016
    %v1157 = vpop.f32.mrb[0].mxu0
    %v1158 = vadd.f32 %v1064, %v1157
    %v1159 = vpop.f32.mrb[0].mxu0
    %1160 = vmatprep.mubr.f32.mxu0 0.0
    %1161 = vmatmul.mubr.f32.gmra.mrb[0].mxu0 %v1017
    %v1162 = vpop.f32.mrb[0].mxu0
    %v1163 = vadd.f32 %v1064, %v1162
    %v1164 = vpop.f32.mrb[0].mxu0
    %1165 = vmatprep.mubr.f32.mxu0 0.0
    %1166 = vmatmul.mubr.f32.gmra.mrb[0].mxu0 %v1018
    %v1167 = vpop.f32.mrb[0].mxu0
    %v1168 = vadd.f32 %v1064, %v1167
    %v1169 = vpop.f32.mrb[0].mxu0
    %1170 = vmatprep.mubr.f32.mxu0 0.0
    %1171 = vmatmul.mubr.f32.gmra.mrb[0].mxu0 %v1019
    %v1172 = vpop.f32.mrb[0].mxu0
    %v1173 = vadd.f32 %v1064, %v1172
    %v1174 = vpop.f32.mrb[0].mxu0
    %1175 = vmatprep.mubr.f32.mxu0 0.0
    %1176 = vmatmul.mubr.f32.gmra.mrb[0].mxu0 %v1020
    %v1177 = vpop.f32.mrb[0].mxu0
    %v1178 = vadd.f32 %v1064, %v1177
    %v1179 = vpop.f32.mrb[0].mxu0
    %1180 = vmatprep.mubr.f32.mxu0 0.0
    %1181 = vmatmul.mubr.f32.gmra.mrb[0].mxu0 %v1021
    %v1182 = vpop.f32.mrb[0].mxu0
    %v1183 = vadd.f32 %v1064, %v1182
    %v1184 = vpop.f32.mrb[0].mxu0
    %1185 = vmatprep.mubr.f32.mxu0 0.0
    %1186 = vmatmul.mubr.f32.gmra.mrb[0].mxu0 %v1022
    %v1187 = vpop.f32.mrb[0].mxu0
    %v1188 = vadd.f32 %v1064, %v1187
    %v1189 = vpop.f32.mrb[0].mxu0
    %1190 = vmatprep.mubr.f32.mxu0 0.0
    %1191 = vmatmul.mubr.f32.gmra.mrb[0].mxu0 %v1023
    %v1192 = vpop.f32.mrb[0].mxu0
    %v1193 = vadd.f32 %v1064, %v1192
    %v1194 = vpop.f32.mrb[0].mxu0
    %1195 = vmatprep.mubr.f32.mxu0 0.0
    %1196 = vmatmul.mubr.f32.gmra.mrb[0].mxu0 %v1024
    %v1197 = vpop.f32.mrb[0].mxu0
    %v1198 = vadd.f32 %v1064, %v1197
    %v1199 = vpop.f32.mrb[0].mxu0
    %1200 = vmatprep.mubr.f32.mxu0 0.0
    %1201 = vmatmul.mubr.f32.gmra.mrb[0].mxu0 %v1025
    %v1202 = vpop.f32.mrb[0].mxu0
    %v1203 = vadd.f32 %v1064, %v1202
    %v1204 = vpop.f32.mrb[0].mxu0
    %1205 = vmatprep.mubr.f32.mxu0 0.0
    %1206 = vmatmul.mubr.f32.gmra.mrb[0].mxu0 %v1026
    %v1207 = vpop.f32.mrb[0].mxu0
    %v1208 = vadd.f32 %v1064, %v1207
    %v1209 = vpop.f32.mrb[0].mxu0
    %1210 = vmatprep.mubr.f32.mxu0 0.0
    %1211 = vmatmul.mubr.f32.gmra.mrb[0].mxu0 %v1027
    %v1212 = vpop.f32.mrb[0].mxu0
    %v1213 = vadd.f32 %v1064, %v1212
    %v1214 = vpop.f32.mrb[0].mxu0
    %1215 = vmatprep.mubr.f32.mxu0 0.0
    %1216 = vmatmul.mubr.f32.gmra.mrb[0].mxu0 %v1028
    %v1217 = vpop.f32.mrb[0].mxu0
    %v1218 = vadd.f32 %v1064, %v1217
    %v1219 = vpop.f32.mrb[0].mxu0
    %1220 = vmatprep.mubr.f32.mxu0 0.0
    %1221 = vmatmul.mubr.f32.gmra.mrb[0].mxu0 %v1029
    %v1222 = vpop.f32.mrb[0].mxu0
    %v1223 = vadd.f32 %v1064, %v1222
    %v1224 = vpop.f32.mrb[0].mxu0
    %1225 = vmatprep.mubr.f32.mxu0 0.0
    %1226 = vmatmul.mubr.f32.gmra.mrb[0].mxu0 %v1030
    %v1227 = vpop.f32.mrb[0].mxu0
    %v1228 = vadd.f32 %v1064, %v1227
    %v1229 = vpop.f32.mrb[0].mxu0
    %1230 = vmatprep.mubr.f32.mxu0 0.0
    %1231 = vmatmul.mubr.f32.gmra.mrb[0].mxu0 %v1031
    %v1232 = vpop.f32.mrb[0].mxu0
    %v1233 = vadd.f32 %v1064, %v1232
    %v1234 = vpop.f32.mrb[0].mxu0
    %1235 = vmatprep.mubr.f32.mxu0 0.0
    %1236 = vmatmul.mubr.f32.gmra.mrb[0].mxu0 %v1032
    %v1237 = vpop.f32.mrb[0].mxu0
    %v1238 = vadd.f32 %v1064, %v1237
    %v1239 = vpop.f32.mrb[0].mxu0
    %1240 = vmatprep.mubr.f32.mxu0 0.0
    %1241 = vmatmul.mubr.f32.gmra.mrb[0].mxu0 %v1033
    %v1242 = vpop.f32.mrb[0].mxu0
    %v1243 = vadd.f32 %v1064, %v1242
    %v1244 = vpop.f32.mrb[0].mxu0
    %1245 = vmatprep.mubr.f32.mxu0 0.0
    %1246 = vmatmul.mubr.f32.gmra.mrb[0].mxu0 %v1034
    %v1247 = vpop.f32.mrb[0].mxu0
    %v1248 = vadd.f32 %v1064, %v1247
    %v1249 = vpop.f32.mrb[0].mxu0
    %1250 = vmatprep.mubr.f32.mxu0 0.0
    %1251 = vmatmul.mubr.f32.gmra.mrb[0].mxu0 %v1035
    %v1252 = vpop.f32.mrb[0].mxu0
    %v1253 = vadd.f32 %v1064, %v1252
    %v1254 = vpop.f32.mrb[0].mxu0
    %1255 = vmatprep.mubr.f32.mxu0 0.0
    %1256 = vmatmul.mubr.f32.gmra.mrb[0].mxu0 %v1036
    %v1257 = vpop.f32.mrb[0].mxu0
    %v1258 = vadd.f32 %v1064, %v1257
    %v1259 = vpop.f32.mrb[0].mxu0
    %1260 = vmatprep.mubr.f32.mxu0 0.0
    %1261 = vmatmul.mubr.f32.gmra.mrb[0].mxu0 %v1037
    %v1262 = vpop.f32.mrb[0].mxu0
    %v1263 = vadd.f32 %v1064, %v1262
    %v1264 = vpop.f32.mrb[0].mxu0
    %1265 = vmatprep.mubr.f32.mxu0 0.0
    %1266 = vmatmul.mubr.f32.gmra.mrb[0].mxu0 %v1038
    %v1267 = vpop.f32.mrb[0].mxu0
    %v1268 = vadd.f32 %v1064, %v1267
    %v1269 = vpop.f32.mrb[0].mxu0
    %1270 = vmatprep.mubr.f32.mxu0 0.0
    %1271 = vmatmul.mubr.f32.gmra.mrb[0].mxu0 %v1039
    %v1272 = vpop.f32.mrb[0].mxu0
    %v1273 = vadd.f32 %v1064, %v1272
    %v1274 = vpop.f32.mrb[0].mxu0
    %1275 = vmatprep.mubr.f32.mxu0 0.0
    %1276 = vmatmul.mubr.f32.gmra.mrb[0].mxu0 %v1040
    %v1277 = vpop.f32.mrb[0].mxu0
    %v1278 = vadd.f32 %v1064, %v1277
    %v1279 = vpop.f32.mrb[0].mxu0
    %1280 = vmatprep.mubr.f32.mxu0 0.0
    %1281 = vmatmul.mubr.f32.gmra.mrb[0].mxu0 %v1041
    %v1282 = vpop.f32.mrb[0].mxu0
    %v1283 = vadd.f32 %v1064, %v1282
    %v1284 = vpop.f32.mrb[0].mxu0
    %1285 = vmatprep.mubr.f32.mxu0 0.0
    %1286 = vmatmul.mubr.f32.gmra.mrb[0].mxu0 %v1042
    %v1287 = vpop.f32.mrb[0].mxu0
    %v1288 = vadd.f32 %v1064, %v1287
    %v1289 = vpop.f32.mrb[0].mxu0
    %1290 = vdwg.mxu0
    %1291 = vmax.xlane.f32.xlu0 %v1133
    %v1292 = vpop.xlane.xlu0 %1291
    %1293 = vmax.xlane.f32.xlu0 %v1138
    %v1294 = vpop.xlane.xlu0 %1293
    %1295 = vmax.xlane.f32.xlu0 %v1143
    %v1296 = vpop.xlane.xlu0 %1295
    %1297 = vmax.xlane.f32.xlu0 %v1148
    %v1298 = vpop.xlane.xlu0 %1297
    %1299 = vmax.xlane.f32.xlu0 %v1153
    %v1300 = vpop.xlane.xlu0 %1299
    %1301 = vmax.xlane.f32.xlu0 %v1158
    %v1302 = vpop.xlane.xlu0 %1301
    %1303 = vmax.xlane.f32.xlu0 %v1163
    %v1304 = vpop.xlane.xlu0 %1303
    %1305 = vmax.xlane.f32.xlu0 %v1168
    %v1306 = vpop.xlane.xlu0 %1305
    %1307 = vmax.xlane.f32.xlu0 %v1173
    %v1308 = vpop.xlane.xlu0 %1307
    %1309 = vmax.xlane.f32.xlu0 %v1178
    %v1310 = vpop.xlane.xlu0 %1309
    %1311 = vmax.xlane.f32.xlu0 %v1183
    %v1312 = vpop.xlane.xlu0 %1311
    %1313 = vmax.xlane.f32.xlu0 %v1188
    %v1314 = vpop.xlane.xlu0 %1313
    %1315 = vmax.xlane.f32.xlu0 %v1193
    %v1316 = vpop.xlane.xlu0 %1315
    %1317 = vmax.xlane.f32.xlu0 %v1198
    %v1318 = vpop.xlane.xlu0 %1317
    %1319 = vmax.xlane.f32.xlu0 %v1203
    %v1320 = vpop.xlane.xlu0 %1319
    %1321 = vmax.xlane.f32.xlu0 %v1208
    %v1322 = vpop.xlane.xlu0 %1321
    %1323 = vmax.xlane.f32.xlu0 %v1213
    %v1324 = vpop.xlane.xlu0 %1323
    %1325 = vmax.xlane.f32.xlu0 %v1218
    %v1326 = vpop.xlane.xlu0 %1325
    %1327 = vmax.xlane.f32.xlu0 %v1223
    %v1328 = vpop.xlane.xlu0 %1327
    %1329 = vmax.xlane.f32.xlu0 %v1228
    %v1330 = vpop.xlane.xlu0 %1329
    %1331 = vmax.xlane.f32.xlu0 %v1233
    %v1332 = vpop.xlane.xlu0 %1331
    %1333 = vmax.xlane.f32.xlu0 %v1238
    %v1334 = vpop.xlane.xlu0 %1333
    %1335 = vmax.xlane.f32.xlu0 %v1243
    %v1336 = vpop.xlane.xlu0 %1335
    %1337 = vmax.xlane.f32.xlu0 %v1248
    %v1338 = vpop.xlane.xlu0 %1337
    %1339 = vmax.xlane.f32.xlu0 %v1253
    %v1340 = vpop.xlane.xlu0 %1339
    %1341 = vmax.xlane.f32.xlu0 %v1258
    %v1342 = vpop.xlane.xlu0 %1341
    %1343 = vmax.xlane.f32.xlu0 %v1263
    %v1344 = vpop.xlane.xlu0 %1343
    %1345 = vmax.xlane.f32.xlu0 %v1268
    %v1346 = vpop.xlane.xlu0 %1345
    %1347 = vmax.xlane.f32.xlu0 %v1273
    %v1348 = vpop.xlane.xlu0 %1347
    %1349 = vmax.xlane.f32.xlu0 %v1278
    %v1350 = vpop.xlane.xlu0 %1349
    %1351 = vmax.xlane.f32.xlu0 %v1283
    %v1352 = vpop.xlane.xlu0 %1351
    %1353 = vmax.xlane.f32.xlu0 %v1288
    %v1354 = vpop.xlane.xlu0 %1353
    %v1355 = vsub.f32 %v1133, %v1292
    %v1356 = vsub.f32 %v1138, %v1294
    %v1357 = vsub.f32 %v1143, %v1296
    %v1358 = vsub.f32 %v1148, %v1298
    %v1359 = vsub.f32 %v1153, %v1300
    %v1360 = vsub.f32 %v1158, %v1302
    %v1361 = vsub.f32 %v1163, %v1304
    %v1362 = vsub.f32 %v1168, %v1306
    %v1363 = vsub.f32 %v1173, %v1308
    %v1364 = vsub.f32 %v1178, %v1310
    %v1365 = vsub.f32 %v1183, %v1312
    %v1366 = vsub.f32 %v1188, %v1314
    %v1367 = vsub.f32 %v1193, %v1316
    %v1368 = vsub.f32 %v1198, %v1318
    %v1369 = vsub.f32 %v1203, %v1320
    %v1370 = vsub.f32 %v1208, %v1322
    %v1371 = vsub.f32 %v1213, %v1324
    %v1372 = vsub.f32 %v1218, %v1326
    %v1373 = vsub.f32 %v1223, %v1328
    %v1374 = vsub.f32 %v1228, %v1330
    %v1375 = vsub.f32 %v1233, %v1332
    %v1376 = vsub.f32 %v1238, %v1334
    %v1377 = vsub.f32 %v1243, %v1336
    %v1378 = vsub.f32 %v1248, %v1338
    %v1379 = vsub.f32 %v1253, %v1340
    %v1380 = vsub.f32 %v1258, %v1342
    %v1381 = vsub.f32 %v1263, %v1344
    %v1382 = vsub.f32 %v1268, %v1346
    %v1383 = vsub.f32 %v1273, %v1348
    %v1384 = vsub.f32 %v1278, %v1350
    %v1385 = vsub.f32 %v1283, %v1352
    %v1386 = vsub.f32 %v1288, %v1354
    %v1387 = vmul.f32 %v1355, 1.442695
    %v1388 = vpow.pop %v1387
    %v1389 = vmul.f32 %v1356, 1.442695
    %v1390 = vpow.pop %v1389
    %v1391 = vmul.f32 %v1357, 1.442695
    %v1392 = vpow.pop %v1391
    %v1393 = vmul.f32 %v1358, 1.442695
    %v1394 = vpow.pop %v1393
    %v1395 = vmul.f32 %v1359, 1.442695
    %v1396 = vpow.pop %v1395
    %v1397 = vmul.f32 %v1360, 1.442695
    %v1398 = vpow.pop %v1397
    %v1399 = vmul.f32 %v1361, 1.442695
    %v1400 = vpow.pop %v1399
    %v1401 = vmul.f32 %v1362, 1.442695
    %v1402 = vpow.pop %v1401
    %v1403 = vmul.f32 %v1363, 1.442695
    %v1404 = vpow.pop %v1403
    %v1405 = vmul.f32 %v1364, 1.442695
    %v1406 = vpow.pop %v1405
    %v1407 = vmul.f32 %v1365, 1.442695
    %v1408 = vpow.pop %v1407
    %v1409 = vmul.f32 %v1366, 1.442695
    %v1410 = vpow.pop %v1409
    %v1411 = vmul.f32 %v1367, 1.442695
    %v1412 = vpow.pop %v1411
    %v1413 = vmul.f32 %v1368, 1.442695
    %v1414 = vpow.pop %v1413
    %v1415 = vmul.f32 %v1369, 1.442695
    %v1416 = vpow.pop %v1415
    %v1417 = vmul.f32 %v1370, 1.442695
    %v1418 = vpow.pop %v1417
    %v1419 = vmul.f32 %v1371, 1.442695
    %v1420 = vpow.pop %v1419
    %v1421 = vmul.f32 %v1372, 1.442695
    %v1422 = vpow.pop %v1421
    %v1423 = vmul.f32 %v1373, 1.442695
    %v1424 = vpow.pop %v1423
    %v1425 = vmul.f32 %v1374, 1.442695
    %v1426 = vpow.pop %v1425
    %v1427 = vmul.f32 %v1375, 1.442695
    %v1428 = vpow.pop %v1427
    %v1429 = vmul.f32 %v1376, 1.442695
    %v1430 = vpow.pop %v1429
    %v1431 = vmul.f32 %v1377, 1.442695
    %v1432 = vpow.pop %v1431
    %v1433 = vmul.f32 %v1378, 1.442695
    %v1434 = vpow.pop %v1433
    %v1435 = vmul.f32 %v1379, 1.442695
    %v1436 = vpow.pop %v1435
    %v1437 = vmul.f32 %v1380, 1.442695
    %v1438 = vpow.pop %v1437
    %v1439 = vmul.f32 %v1381, 1.442695
    %v1440 = vpow.pop %v1439
    %v1441 = vmul.f32 %v1382, 1.442695
    %v1442 = vpow.pop %v1441
    %v1443 = vmul.f32 %v1383, 1.442695
    %v1444 = vpow.pop %v1443
    %v1445 = vmul.f32 %v1384, 1.442695
    %v1446 = vpow.pop %v1445
    %v1447 = vmul.f32 %v1385, 1.442695
    %v1448 = vpow.pop %v1447
    %v1449 = vmul.f32 %v1386, 1.442695
    %v1450 = vpow.pop %v1449
    %1451 = vadd.xlane.f32.xlu0 %v1388
    %v1452 = vpop.xlane.xlu0 %1451
    %1453 = vadd.xlane.f32.xlu0 %v1390
    %v1454 = vpop.xlane.xlu0 %1453
    %1455 = vadd.xlane.f32.xlu0 %v1392
    %v1456 = vpop.xlane.xlu0 %1455
    %1457 = vadd.xlane.f32.xlu0 %v1394
    %v1458 = vpop.xlane.xlu0 %1457
    %1459 = vadd.xlane.f32.xlu0 %v1396
    %v1460 = vpop.xlane.xlu0 %1459
    %1461 = vadd.xlane.f32.xlu0 %v1398
    %v1462 = vpop.xlane.xlu0 %1461
    %1463 = vadd.xlane.f32.xlu0 %v1400
    %v1464 = vpop.xlane.xlu0 %1463
    %1465 = vadd.xlane.f32.xlu0 %v1402
    %v1466 = vpop.xlane.xlu0 %1465
    %1467 = vadd.xlane.f32.xlu0 %v1404
    %v1468 = vpop.xlane.xlu0 %1467
    %1469 = vadd.xlane.f32.xlu0 %v1406
    %v1470 = vpop.xlane.xlu0 %1469
    %1471 = vadd.xlane.f32.xlu0 %v1408
    %v1472 = vpop.xlane.xlu0 %1471
    %1473 = vadd.xlane.f32.xlu0 %v1410
    %v1474 = vpop.xlane.xlu0 %1473
    %1475 = vadd.xlane.f32.xlu0 %v1412
    %v1476 = vpop.xlane.xlu0 %1475
    %1477 = vadd.xlane.f32.xlu0 %v1414
    %v1478 = vpop.xlane.xlu0 %1477
    %1479 = vadd.xlane.f32.xlu0 %v1416
    %v1480 = vpop.xlane.xlu0 %1479
    %1481 = vadd.xlane.f32.xlu0 %v1418
    %v1482 = vpop.xlane.xlu0 %1481
    %1483 = vadd.xlane.f32.xlu0 %v1420
    %v1484 = vpop.xlane.xlu0 %1483
    %1485 = vadd.xlane.f32.xlu0 %v1422
    %v1486 = vpop.xlane.xlu0 %1485
    %1487 = vadd.xlane.f32.xlu0 %v1424
    %v1488 = vpop.xlane.xlu0 %1487
    %1489 = vadd.xlane.f32.xlu0 %v1426
    %v1490 = vpop.xlane.xlu0 %1489
    %1491 = vadd.xlane.f32.xlu0 %v1428
    %v1492 = vpop.xlane.xlu0 %1491
    %1493 = vadd.xlane.f32.xlu0 %v1430
    %v1494 = vpop.xlane.xlu0 %1493
    %1495 = vadd.xlane.f32.xlu0 %v1432
    %v1496 = vpop.xlane.xlu0 %1495
    %1497 = vadd.xlane.f32.xlu0 %v1434
    %v1498 = vpop.xlane.xlu0 %1497
    %1499 = vadd.xlane.f32.xlu0 %v1436
    %v1500 = vpop.xlane.xlu0 %1499
    %1501 = vadd.xlane.f32.xlu0 %v1438
    %v1502 = vpop.xlane.xlu0 %1501
    %1503 = vadd.xlane.f32.xlu0 %v1440
    %v1504 = vpop.xlane.xlu0 %1503
    %1505 = vadd.xlane.f32.xlu0 %v1442
    %v1506 = vpop.xlane.xlu0 %1505
    %1507 = vadd.xlane.f32.xlu0 %v1444
    %v1508 = vpop.xlane.xlu0 %1507
    %1509 = vadd.xlane.f32.xlu0 %v1446
    %v1510 = vpop.xlane.xlu0 %1509
    %1511 = vadd.xlane.f32.xlu0 %v1448
    %v1512 = vpop.xlane.xlu0 %1511
    %1513 = vadd.xlane.f32.xlu0 %v1450
    %v1514 = vpop.xlane.xlu0 %1513
    %v1515 = vlog2.pop %v1452
    %v1516 = vmul.f32 %v1515, 0.6931472
    %v1517 = vlog2.pop %v1454
    %v1518 = vmul.f32 %v1517, 0.6931472
    %v1519 = vlog2.pop %v1456
    %v1520 = vmul.f32 %v1519, 0.6931472
    %v1521 = vlog2.pop %v1458
    %v1522 = vmul.f32 %v1521, 0.6931472
    %v1523 = vlog2.pop %v1460
    %v1524 = vmul.f32 %v1523, 0.6931472
    %v1525 = vlog2.pop %v1462
    %v1526 = vmul.f32 %v1525, 0.6931472
    %v1527 = vlog2.pop %v1464
    %v1528 = vmul.f32 %v1527, 0.6931472
    %v1529 = vlog2.pop %v1466
    %v1530 = vmul.f32 %v1529, 0.6931472
    %v1531 = vlog2.pop %v1468
    %v1532 = vmul.f32 %v1531, 0.6931472
    %v1533 = vlog2.pop %v1470
    %v1534 = vmul.f32 %v1533, 0.6931472
    %v1535 = vlog2.pop %v1472
    %v1536 = vmul.f32 %v1535, 0.6931472
    %v1537 = vlog2.pop %v1474
    %v1538 = vmul.f32 %v1537, 0.6931472
    %v1539 = vlog2.pop %v1476
    %v1540 = vmul.f32 %v1539, 0.6931472
    %v1541 = vlog2.pop %v1478
    %v1542 = vmul.f32 %v1541, 0.6931472
    %v1543 = vlog2.pop %v1480
    %v1544 = vmul.f32 %v1543, 0.6931472
    %v1545 = vlog2.pop %v1482
    %v1546 = vmul.f32 %v1545, 0.6931472
    %v1547 = vlog2.pop %v1484
    %v1548 = vmul.f32 %v1547, 0.6931472
    %v1549 = vlog2.pop %v1486
    %v1550 = vmul.f32 %v1549, 0.6931472
    %v1551 = vlog2.pop %v1488
    %v1552 = vmul.f32 %v1551, 0.6931472
    %v1553 = vlog2.pop %v1490
    %v1554 = vmul.f32 %v1553, 0.6931472
    %v1555 = vlog2.pop %v1492
    %v1556 = vmul.f32 %v1555, 0.6931472
    %v1557 = vlog2.pop %v1494
    %v1558 = vmul.f32 %v1557, 0.6931472
    %v1559 = vlog2.pop %v1496
    %v1560 = vmul.f32 %v1559, 0.6931472
    %v1561 = vlog2.pop %v1498
    %v1562 = vmul.f32 %v1561, 0.6931472
    %v1563 = vlog2.pop %v1500
    %v1564 = vmul.f32 %v1563, 0.6931472
    %v1565 = vlog2.pop %v1502
    %v1566 = vmul.f32 %v1565, 0.6931472
    %v1567 = vlog2.pop %v1504
    %v1568 = vmul.f32 %v1567, 0.6931472
    %v1569 = vlog2.pop %v1506
    %v1570 = vmul.f32 %v1569, 0.6931472
    %v1571 = vlog2.pop %v1508
    %v1572 = vmul.f32 %v1571, 0.6931472
    %v1573 = vlog2.pop %v1510
    %v1574 = vmul.f32 %v1573, 0.6931472
    %v1575 = vlog2.pop %v1512
    %v1576 = vmul.f32 %v1575, 0.6931472
    %v1577 = vlog2.pop %v1514
    %v1578 = vmul.f32 %v1577, 0.6931472
    %v1579 = vsub.f32 %v1355, %v1516
    %v1580 = vsub.f32 %v1356, %v1518
    %v1581 = vsub.f32 %v1357, %v1520
    %v1582 = vsub.f32 %v1358, %v1522
    %v1583 = vsub.f32 %v1359, %v1524
    %v1584 = vsub.f32 %v1360, %v1526
    %v1585 = vsub.f32 %v1361, %v1528
    %v1586 = vsub.f32 %v1362, %v1530
    %v1587 = vsub.f32 %v1363, %v1532
    %v1588 = vsub.f32 %v1364, %v1534
    %v1589 = vsub.f32 %v1365, %v1536
    %v1590 = vsub.f32 %v1366, %v1538
    %v1591 = vsub.f32 %v1367, %v1540
    %v1592 = vsub.f32 %v1368, %v1542
    %v1593 = vsub.f32 %v1369, %v1544
    %v1594 = vsub.f32 %v1370, %v1546
    %v1595 = vsub.f32 %v1371, %v1548
    %v1596 = vsub.f32 %v1372, %v1550
    %v1597 = vsub.f32 %v1373, %v1552
    %v1598 = vsub.f32 %v1374, %v1554
    %v1599 = vsub.f32 %v1375, %v1556
    %v1600 = vsub.f32 %v1376, %v1558
    %v1601 = vsub.f32 %v1377, %v1560
    %v1602 = vsub.f32 %v1378, %v1562
    %v1603 = vsub.f32 %v1379, %v1564
    %v1604 = vsub.f32 %v1380, %v1566
    %v1605 = vsub.f32 %v1381, %v1568
    %v1606 = vsub.f32 %v1382, %v1570
    %v1607 = vsub.f32 %v1383, %v1572
    %v1608 = vsub.f32 %v1384, %v1574
    %v1609 = vsub.f32 %v1385, %v1576
    %v1610 = vsub.f32 %v1386, %v1578
    %1611 = vst [vmem:[#allocation10] sm:$0xff] %v1579
    %1612 = vst [vmem:[#allocation10 + $0x8] sm:$0xff] %v1580
    %1613 = vst [vmem:[#allocation10 + $0x10] sm:$0xff] %v1581
    %1614 = vst [vmem:[#allocation10 + $0x18] sm:$0xff] %v1582
    %1615 = vst [vmem:[#allocation10 + $0x20] sm:$0xff] %v1583
    %1616 = vst [vmem:[#allocation10 + $0x28] sm:$0xff] %v1584
    %1617 = vst [vmem:[#allocation10 + $0x30] sm:$0xff] %v1585
    %1618 = vst [vmem:[#allocation10 + $0x38] sm:$0xff] %v1586
    %1619 = vst [vmem:[#allocation10 + $0x40] sm:$0xff] %v1587
    %1620 = vst [vmem:[#allocation10 + $0x48] sm:$0xff] %v1588
    %1621 = vst [vmem:[#allocation10 + $0x50] sm:$0xff] %v1589
    %1622 = vst [vmem:[#allocation10 + $0x58] sm:$0xff] %v1590
    %1623 = vst [vmem:[#allocation10 + $0x60] sm:$0xff] %v1591
    %1624 = vst [vmem:[#allocation10 + $0x68] sm:$0xff] %v1592
    %1625 = vst [vmem:[#allocation10 + $0x70] sm:$0xff] %v1593
    %1626 = vst [vmem:[#allocation10 + $0x78] sm:$0xff] %v1594
    %1627 = vst [vmem:[#allocation10 + $0x80] sm:$0xff] %v1595
    %1628 = vst [vmem:[#allocation10 + $0x88] sm:$0xff] %v1596
    %1629 = vst [vmem:[#allocation10 + $0x90] sm:$0xff] %v1597
    %1630 = vst [vmem:[#allocation10 + $0x98] sm:$0xff] %v1598
    %1631 = vst [vmem:[#allocation10 + $0xa0] sm:$0xff] %v1599
    %1632 = vst [vmem:[#allocation10 + $0xa8] sm:$0xff] %v1600
    %1633 = vst [vmem:[#allocation10 + $0xb0] sm:$0xff] %v1601
    %1634 = vst [vmem:[#allocation10 + $0xb8] sm:$0xff] %v1602
    %1635 = vst [vmem:[#allocation10 + $0xc0] sm:$0xff] %v1603
    %1636 = vst [vmem:[#allocation10 + $0xc8] sm:$0xff] %v1604
    %1637 = vst [vmem:[#allocation10 + $0xd0] sm:$0xff] %v1605
    %1638 = vst [vmem:[#allocation10 + $0xd8] sm:$0xff] %v1606
    %1639 = vst [vmem:[#allocation10 + $0xe0] sm:$0xff] %v1607
    %1640 = vst [vmem:[#allocation10 + $0xe8] sm:$0xff] %v1608
    %1641 = vst [vmem:[#allocation10 + $0xf0] sm:$0xff] %v1609
    %1642 = vst [vmem:[#allocation10 + $0xf8] sm:$0xff] %v1610
    // Predicated region
    $region46: #{tpu_custom_call.1} parent=1 // pred_check
      _
    $region47: #{tpu_custom_call.1} parent=1 // pred_check_branch
      %1644 = sbr.rel (0) target = $region49
    $region48: #{tpu_custom_call.1} parent=1 // pred_region
      %s1646 = ssub.s32 4096, 4096
      %1647 = vsyncadd [#allocation4], %s1646
      %s1648 = sshll.u32 [#allocation10], 4
      %s1649 = int_to_ptr.vmem [resolvable:$true] %s1648
      %1654 = dma.vmem_to_hbm [thread:$0]  %s1649, 4096, %s7, [#allocation4], 128, 128, 8
    $region49: #{tpu_custom_call.1} parent=1 // pred_fallthru
      _
    // Predicated region
    $region50: #{tpu_custom_call.1} parent=1 // pred_check
      _
    $region51: #{tpu_custom_call.1} parent=1 // pred_check_branch
      %1656 = sbr.rel (0) target = $region53
    $region52: #{tpu_custom_call.1} parent=1 // pred_region
      %1657 = dma.done [#allocation4], 4096
    $region53: #{tpu_custom_call.1} parent=1 // pred_fallthru
      _
    %1658 = vsyncpa [#allocation3], 1
    %1659 = vsyncpa [#allocation6], 1
    %1660 = vsyncpa [#allocation9], 1
    %1661 = vsyncpa [#allocation4], 1

</llo_original>
